<compile_context>
chip_gen: v6e
topology: v6e:2x2x1
jax: 0.10.0
libtpu: 0.0.40
codegen_flags: <defaults>
</compile_context>

<pallas_src>
import jax
import jax.numpy as jnp
import numpy as np
from jax.experimental import pallas as pl
from jax.experimental.pallas import tpu as pltpu


# ----------------------------- in-kernel helpers -----------------------------

def _gelu_tanh(x):
    c = np.float32(np.sqrt(2.0 / np.pi))
    return 0.5 * x * (1.0 + jnp.tanh(c * (x + np.float32(0.044715) * x * x * x)))


# --------------------------------- kernel ------------------------------------

def fnn_kernel(x_ref, w1_ref, b1_ref, w2_ref, b2_ref, o_ref):
    # grid = (row_tiles, d_ff_tiles); axis 1 is the reduction over d_ff.
    # o_ref's block index is constant over axis 1 -> it is the f32 accumulator.
    j = pl.program_id(1)

    @pl.when(j == 0)
    def _init():
        o_ref[...] = jnp.zeros_like(o_ref)

    # (tm, D) @ (D, tf) on the MXU with bf16 operands, f32 accumulation.
    x_b = x_ref[...].astype(jnp.bfloat16)            # cast in-kernel (no extra HBM pass)
    h = jnp.dot(x_b, w1_ref[...], preferred_element_type=jnp.float32)
    h = h + b1_ref[...]                               # f32 bias
    h = _gelu_tanh(h)                                 # f32 on VPU/EUP (free slots)

    # Partial contribution of this d_ff tile: (tm, tf) @ (tf, D).
    o_ref[...] += jnp.dot(h.astype(w2_ref.dtype), w2_ref[...],
                          preferred_element_type=jnp.float32)

    @pl.when(j == pl.num_programs(1) - 1)
    def _finalize():
        o_ref[...] += b2_ref[...]                     # f32 bias, broadcast over rows


# ------------------------------ tiling helpers --------------------------------

def _pick_tile_ff(d_ff, cap):
    """Largest multiple-of-128 divisor of d_ff that is <= cap (d_ff itself if it fits
    or no such divisor exists)."""
    if d_ff <= cap:
        return d_ff
    t = (cap // 128) * 128
    while t >= 128:
        if d_ff % t == 0:
            return t
        t -= 128
    return d_ff


def _choose_tm(M, tile_m):
    """Start at tile_m; shrink (>=128) so the row axis has >=2 tiles when M allows
    (keeps both v7x TensorCores busy via the 'parallel' axis)."""
    tm = max(128, tile_m)
    while tm > 128 and M < 2 * tm:
        tm //= 2
    return max(tm, 128)


def _vmem_limit_bytes():
    try:
        cap = pltpu.get_tpu_info().vmem_capacity_bytes
        return min(int(cap * 3 // 4), 100 * 1024 * 1024)   # ~96 MiB on v5e/v6e, ~48 MiB on v7x
    except Exception:
        return 48 * 1024 * 1024                            # safe everywhere (fits v7x 64 MiB)


def _vmem_estimate(tm, tf, D, x_itemsize):
    # double-buffered input/output blocks
    x_blk  = 2 * tm * D * x_itemsize
    w1_blk = 2 * D * tf * 2
    w2_blk = 2 * tf * D * 2
    b_blk  = 2 * (tf + D) * 4
    o_blk  = 2 * tm * D * 4
    return x_blk + w1_blk + w2_blk + b_blk + o_blk


# --------------------------------- wrapper ------------------------------------

def fnn_forward(x, w1, b1, w2, b2, *, tile_m=512, tile_ff=512):
    """y = gelu(x @ W1 + b1) @ W2 + b2, dropout == identity (eval)."""
    orig_shape = x.shape
    D = orig_shape[-1]
    d_ff = w1.shape[1]
    assert w1.shape == (D, d_ff) and w2.shape == (d_ff, D)
    assert b1.size == d_ff and b2.size == D
    assert D % 128 == 0, "keep d_model a multiple of 128 for lane-dense tiles"

    # Flatten all leading dims into one row axis so the MXU sees >=128-row tiles.
    xm = x.reshape(-1, D)
    M = xm.shape[0]

    vmem_limit = _vmem_limit_bytes()
    budget = int(vmem_limit * 0.9)

    tm = _choose_tm(M, tile_m)
    tf = _pick_tile_ff(d_ff, tile_ff)

    # Shrink to fit the per-generation VMEM budget: tf first (only changes the
    # reduction-step count), then tm (the arithmetic-intensity lever).
    x_itemsize = jnp.dtype(xm.dtype).itemsize
    while _vmem_estimate(tm, tf, D, x_itemsize) > budget and tf > 128:
        new_tf = _pick_tile_ff(d_ff, tf // 2)
        if new_tf >= tf:
            break
        tf = new_tf
    while _vmem_estimate(tm, tf, D, x_itemsize) > budget and tm > 128:
        tm //= 2

    # Pad the row axis to a multiple of tm (padded rows are sliced off below).
    pad = (-M) % tm
    if pad:
        xm = jnp.pad(xm, ((0, pad), (0, 0)))
    Mp = xm.shape[0]

    # bf16 matmul weights (MXU-native, halves weight DMA bytes); f32 biases.
    w1_b = w1.astype(jnp.bfloat16)
    w2_b = w2.astype(jnp.bfloat16)
    b1_2 = b1.reshape(1, d_ff).astype(jnp.float32)
    b2_2 = b2.reshape(1, D).astype(jnp.float32)

    grid = (Mp // tm, d_ff // tf)
    n_row_tiles = grid[0]

    cost = pl.CostEstimate(
        flops=4 * Mp * D * d_ff,                       # two matmuls
        transcendentals=Mp * d_ff,                     # one tanh per hidden element
        bytes_accessed=(Mp * D * x_itemsize            # x in
                        + n_row_tiles * 2 * D * d_ff * 2   # W1/W2 re-streamed per row tile
                        + (d_ff + D) * 4                   # biases
                        + Mp * D * 4),                     # f32 out
    )

    out = pl.pallas_call(
        fnn_kernel,
        out_shape=jax.ShapeDtypeStruct((Mp, D), jnp.float32),
        grid=grid,
        in_specs=[
            pl.BlockSpec((tm, D), lambda i, j: (i, 0)),    # x rows (const over j)
            pl.BlockSpec((D, tf), lambda i, j: (0, j)),    # W1 column tile
            pl.BlockSpec((1, tf), lambda i, j: (0, j)),    # b1 tile
            pl.BlockSpec((tf, D), lambda i, j: (j, 0)),    # W2 row tile
            pl.BlockSpec((1, D), lambda i, j: (0, 0)),     # b2 (resident)
        ],
        # Lane-dense (D % 128 == 0); constant over j -> acts as the f32 accumulator.
        out_specs=pl.BlockSpec((tm, D), lambda i, j: (i, 0)),
        compiler_params=pltpu.CompilerParams(
            dimension_semantics=("parallel", "arbitrary"),
            vmem_limit_bytes=vmem_limit,
        ),
        cost_estimate=cost,
    )(xm, w1_b, b1_2, w2_b, b2_2)

    if pad:
        out = out[:M]   # NOTE: must keep — padded rows are gelu(b1)@W2 + b2, not zeros
    return out.reshape(orig_shape)


# --------------------------- pure-JAX f32 reference ---------------------------

def _ref_fnn(x, w1, b1, w2, b2):
    h = x @ w1 + b1
    h = _gelu_tanh(h)
    return h @ w2 + b2


# ---------------------------------- main --------------------------------------

if __name__ == "__main__":
    B, T, D, D_FF = 2, 128, 256, 512   # d_model=256, d_ff=512 (lane-aligned)

    key = jax.random.PRNGKey(0)
    kx, k1, kb1, k2, kb2 = jax.random.split(key, 5)
    x = jax.random.normal(kx, (B, T, D), jnp.float32)
    w1 = jax.random.normal(k1, (D, D_FF), jnp.float32) * 0.02
    b1 = jax.random.normal(kb1, (D_FF,), jnp.float32) * 0.02
    w2 = jax.random.normal(k2, (D_FF, D), jnp.float32) * 0.02
    b2 = jax.random.normal(kb2, (D,), jnp.float32) * 0.02

    y = fnn_forward(x, w1, b1, w2, b2)
    y = jax.block_until_ready(y)

    ref = _ref_fnn(x, w1, b1, w2, b2)
    # bf16 matmul operands vs f32 reference -> ~1e-3 abs error at these magnitudes.
    np.testing.assert_allclose(np.asarray(y), np.asarray(ref), rtol=2e-2, atol=2e-2)
    assert y.shape == (B, T, D)
    print("KERNEL_OK")
</pallas_src>

<mosaic_0001>
module attributes {stable_mosaic.version = 11 : i64} {
  func.func @fnn_kernel(%arg0: i32, %arg1: i32, %arg2: memref<128x256xf32, #tpu.memory_space<vmem>>, %arg3: memref<256x512xbf16, #tpu.memory_space<vmem>>, %arg4: memref<1x512xf32, #tpu.memory_space<vmem>>, %arg5: memref<512x256xbf16, #tpu.memory_space<vmem>>, %arg6: memref<1x256xf32, #tpu.memory_space<vmem>>, %arg7: memref<128x256xf32, #tpu.memory_space<vmem>>) attributes {dimension_semantics = [#tpu.dimension_semantics<parallel>, #tpu.dimension_semantics<arbitrary>], iteration_bounds = array<i64: 2, 1>, scalar_prefetch = 0 : i64, scratch_operands = 0 : i64, tpu.core_type = #tpu.core_type<tc>, window_params = [{transform_indices = @transform_0, window_bounds = array<i64: 128, 256>}, {transform_indices = @transform_1, window_bounds = array<i64: 256, 512>}, {transform_indices = @transform_2, window_bounds = array<i64: 1, 512>}, {transform_indices = @transform_3, window_bounds = array<i64: 512, 256>}, {pipeline_mode = #tpu.pipeline_mode<synchronous>, transform_indices = @transform_4, window_bounds = array<i64: 1, 256>}, {transform_indices = @transform_5, window_bounds = array<i64: 128, 256>}]} {
    %c0_i32 = arith.constant 0 : i32
    %0 = arith.cmpi eq, %arg1, %c0_i32 : i32
    %1 = arith.extui %0 : i1 to i32
    %c0_i32_0 = arith.constant 0 : i32
    %2 = arith.cmpi ne, %1, %c0_i32_0 : i32
    scf.if %2 {
      %cst_19 = arith.constant 0.000000e+00 : f32
      %32 = vector.broadcast %cst_19 : f32 to vector<128x256xf32>
      %c0_20 = arith.constant 0 : index
      %c0_21 = arith.constant 0 : index
      %33 = vector.load %arg7[%c0_20, %c0_21] : memref<128x256xf32, #tpu.memory_space<vmem>>, vector<128x256xf32>
      tpu.vector_store %arg7[%c0_20, %c0_21], %32 {strides = array<i32>} : memref<128x256xf32, #tpu.memory_space<vmem>>, vector<128x256xf32>,
    } else {
    }
    %c0 = arith.constant 0 : index
    %c0_1 = arith.constant 0 : index
    %3 = vector.load %arg2[%c0, %c0_1] : memref<128x256xf32, #tpu.memory_space<vmem>>, vector<128x256xf32>
    %4 = arith.truncf %3 : vector<128x256xf32> to vector<128x256xbf16>
    %c0_2 = arith.constant 0 : index
    %c0_3 = arith.constant 0 : index
    %5 = vector.load %arg3[%c0_2, %c0_3] : memref<256x512xbf16, #tpu.memory_space<vmem>>, vector<256x512xbf16>
    %cst = arith.constant dense<0.000000e+00> : vector<128x512xf32>
    %6 = tpu.matmul %4, %5, %cst {dimension_numbers = #tpu.dot_dimension_numbers<[1], [0], [0], [1], [0, 0, 1, 1], [], []>} : vector<128x256xbf16>, vector<256x512xbf16>, vector<128x512xf32> -> vector<128x512xf32>
    %c0_4 = arith.constant 0 : index
    %c0_5 = arith.constant 0 : index
    %7 = vector.load %arg4[%c0_4, %c0_5] : memref<1x512xf32, #tpu.memory_space<vmem>>, vector<1x512xf32>
    %8 = vector.broadcast %7 : vector<1x512xf32> to vector<128x512xf32>
    %9 = arith.addf %6, %8 : vector<128x512xf32>
    %cst_6 = arith.constant 5.000000e-01 : f32
    %10 = vector.broadcast %cst_6 : f32 to vector<128x512xf32>
    %11 = arith.mulf %10, %9 : vector<128x512xf32>
    %cst_7 = arith.constant 4.471500e-02 : f32
    %12 = vector.broadcast %cst_7 : f32 to vector<128x512xf32>
    %13 = arith.mulf %12, %9 : vector<128x512xf32>
    %14 = arith.mulf %13, %9 : vector<128x512xf32>
    %15 = arith.mulf %14, %9 : vector<128x512xf32>
    %16 = arith.addf %9, %15 : vector<128x512xf32>
    %cst_8 = arith.constant 0.797884583 : f32
    %17 = vector.broadcast %cst_8 : f32 to vector<128x512xf32>
    %18 = arith.mulf %17, %16 : vector<128x512xf32>
    %19 = math.tanh %18 : vector<128x512xf32>
    %cst_9 = arith.constant 1.000000e+00 : f32
    %20 = vector.broadcast %cst_9 : f32 to vector<128x512xf32>
    %21 = arith.addf %20, %19 : vector<128x512xf32>
    %22 = arith.mulf %11, %21 : vector<128x512xf32>
    %c0_10 = arith.constant 0 : index
    %c0_11 = arith.constant 0 : index
    %23 = vector.load %arg7[%c0_10, %c0_11] : memref<128x256xf32, #tpu.memory_space<vmem>>, vector<128x256xf32>
    %24 = arith.truncf %22 : vector<128x512xf32> to vector<128x512xbf16>
    %c0_12 = arith.constant 0 : index
    %c0_13 = arith.constant 0 : index
    %25 = vector.load %arg5[%c0_12, %c0_13] : memref<512x256xbf16, #tpu.memory_space<vmem>>, vector<512x256xbf16>
    %cst_14 = arith.constant dense<0.000000e+00> : vector<128x256xf32>
    %26 = tpu.matmul %24, %25, %cst_14 {dimension_numbers = #tpu.dot_dimension_numbers<[1], [0], [0], [1], [0, 0, 1, 1], [], []>} : vector<128x512xbf16>, vector<512x256xbf16>, vector<128x256xf32> -> vector<128x256xf32>
    %27 = arith.addf %23, %26 : vector<128x256xf32>
    %c0_15 = arith.constant 0 : index
    %c0_16 = arith.constant 0 : index
    %28 = vector.load %arg7[%c0_15, %c0_16] : memref<128x256xf32, #tpu.memory_space<vmem>>, vector<128x256xf32>
    tpu.vector_store %arg7[%c0_15, %c0_16], %27 {strides = array<i32>} : memref<128x256xf32, #tpu.memory_space<vmem>>, vector<128x256xf32>,
    %c0_i32_17 = arith.constant 0 : i32
    %29 = arith.cmpi eq, %arg1, %c0_i32_17 : i32
    %30 = arith.extui %29 : i1 to i32
    %c0_i32_18 = arith.constant 0 : i32
    %31 = arith.cmpi ne, %30, %c0_i32_18 : i32
    scf.if %31 {
      %c0_19 = arith.constant 0 : index
      %c0_20 = arith.constant 0 : index
      %32 = vector.load %arg7[%c0_19, %c0_20] : memref<128x256xf32, #tpu.memory_space<vmem>>, vector<128x256xf32>
      %c0_21 = arith.constant 0 : index
      %c0_22 = arith.constant 0 : index
      %33 = vector.load %arg6[%c0_21, %c0_22] : memref<1x256xf32, #tpu.memory_space<vmem>>, vector<1x256xf32>
      %34 = vector.broadcast %33 : vector<1x256xf32> to vector<128x256xf32>
      %35 = arith.addf %32, %34 : vector<128x256xf32>
      %c0_23 = arith.constant 0 : index
      %c0_24 = arith.constant 0 : index
      %36 = vector.load %arg7[%c0_23, %c0_24] : memref<128x256xf32, #tpu.memory_space<vmem>>, vector<128x256xf32>
      tpu.vector_store %arg7[%c0_23, %c0_24], %35 {strides = array<i32>} : memref<128x256xf32, #tpu.memory_space<vmem>>, vector<128x256xf32>,
    } else {
    }
    return
  }
  func.func @transform_0(%arg0: i32, %arg1: i32) -> (i32, i32) {
    %c0_i32 = arith.constant 0 : i32
    %c0_i32_0 = arith.constant 0 : i32
    return %arg0, %c0_i32 : i32, i32
  }
  func.func @transform_1(%arg0: i32, %arg1: i32) -> (i32, i32) {
    %c0_i32 = arith.constant 0 : i32
    %c0_i32_0 = arith.constant 0 : i32
    return %c0_i32, %arg1 : i32, i32
  }
  func.func @transform_2(%arg0: i32, %arg1: i32) -> (i32, i32) {
    %c0_i32 = arith.constant 0 : i32
    %c0_i32_0 = arith.constant 0 : i32
    return %c0_i32, %arg1 : i32, i32
  }
  func.func @transform_3(%arg0: i32, %arg1: i32) -> (i32, i32) {
    %c0_i32 = arith.constant 0 : i32
    %c0_i32_0 = arith.constant 0 : i32
    return %arg1, %c0_i32 : i32, i32
  }
  func.func @transform_4(%arg0: i32, %arg1: i32) -> (i32, i32) {
    %c0_i32 = arith.constant 0 : i32
    %c0_i32_0 = arith.constant 0 : i32
    %c0_i32_1 = arith.constant 0 : i32
    return %c0_i32, %c0_i32_0 : i32, i32
  }
  func.func @transform_5(%arg0: i32, %arg1: i32) -> (i32, i32) {
    %c0_i32 = arith.constant 0 : i32
    %c0_i32_0 = arith.constant 0 : i32
    return %arg0, %c0_i32 : i32, i32
  }
}

</mosaic_0001>

<llo_original>
// kernel: tpu_custom_call.1
$region0: #{tpu_custom_call.1}
  #allocation0 [shape = 'u32[]', space=smem, size = 0x4, offset = 0x4, fixed_abs, tag = 'smem constant byte address 0x4 - core index']
  #allocation1 [shape = 'u32[144,128]{1,0:T(1,128)}', space=vmem, size = 0x12000, scoped, tag = 'internal scratch']
  %s0 = inlined_call_operand.hbm [shape: f32[256,256], index: 0, kind: input, shape index: {}]
  %s1 = inlined_call_operand.hbm [shape: bf16[256,512], index: 1, kind: input, shape index: {}]
  %s2 = inlined_call_operand.hbm [shape: f32[1,512], index: 2, kind: input, shape index: {}]
  %s3 = inlined_call_operand.hbm [shape: bf16[512,256], index: 3, kind: input, shape index: {}]
  %s4 = inlined_call_operand.vmem [shape: f32[1,256], index: 4, kind: input, shape index: {}]
  %s5 = inlined_call_operand.hbm [shape: f32[256,256], index: 5, kind: output, shape index: {}]
  %s6 = sld [smem:[#allocation0]]
  $region77: #{tpu_custom_call.1} parent=0
    _
  %s8 = ssub.s32 1, %s6
  %s9 = scalar_select 0, %s8, %s6
  $region1: #{tpu_custom_call.1} parent=0
    #allocation2 [shape = 'u8[262144]{0}', space=vmem, size = 0x40000, scoped, tag = 'input window, operand 0']
    #allocation3 [shape = 's32[2]{0}', space=sflag, size = 0x8, scoped, tag = 'scoped memory for tpu_custom_call.1']
    #allocation4 [shape = 's32[2]{0}', space=sflag, size = 0x8, scoped, tag = 'scoped memory for tpu_custom_call.1']
    #allocation5 [shape = 'u8[262144]{0}', space=vmem, size = 0x40000, scoped, tag = 'input window, operand 1, single buffered']
    #allocation6 [shape = 's32[1]{0}', space=sflag, size = 0x4, scoped, tag = 'scoped memory for tpu_custom_call.1']
    #allocation7 [shape = 'u8[2048]{0}', space=vmem, size = 0x800, scoped, tag = 'input window, operand 2, single buffered']
    #allocation8 [shape = 'u8[262144]{0}', space=vmem, size = 0x40000, scoped, tag = 'input window, operand 3, single buffered']
    #allocation9 [shape = 's32[1]{0}', space=sflag, size = 0x4, scoped, tag = 'scoped memory for tpu_custom_call.1']
    #allocation10 [shape = 'u8[262144]{0}', space=vmem, size = 0x40000, scoped, tag = 'output window, operand 0']
    %10 = vsyncpa [#allocation3], 0
    %s11 = scalar_lea.sflag [#allocation3], 1
    %12 = vsyncpa %s11, 0
    %13 = vsyncpa [#allocation6], 0
    %14 = vsyncpa [#allocation9], 0
    %15 = vsyncpa [#allocation4], 0
    %s16 = scalar_lea.sflag [#allocation4], 1
    %17 = vsyncpa %s16, 0
    loop: start=0, step=1, limit=4
    $region2: #{tpu_custom_call.1} parent=1 // loop_pre_header
      _
    $region3: #{tpu_custom_call.1} parent=1 // loop_header
      %s19 = sphi 0, %s23
      %p20 = scmp.ge.s32.totalorder %s19, 4
      %s26 = sphi 0, %s38
      %s27 = sphi 0, %s34
      %s28 = sphi 0, %s26
      %s29 = sphi 0, %s27
      %s30 = sphi 0, %s28
      %s31 = sphi 0, %s29
      %s41 = sphi 0, %s43
      %s44 = sphi 0, %s41
      %s45 = sphi 0, %s44
      %s61 = sphi 0, %s45
      %s67 = sphi 0, %s69
      %s70 = sphi 0, %s67
      %s71 = sphi 0, %s70
      %s87 = sphi 0, %s71
      %s93 = sphi 0, %s95
      %s96 = sphi 0, %s93
      %s97 = sphi 0, %s96
      %s113 = sphi 0, %s97
      %s119 = sphi 0, %s121
      %s122 = sphi 0, %s119
      %s123 = sphi 0, %s122
      %s139 = sphi 0, %s123
      %s143 = sphi 0, %s143
      %s145 = sphi 0, %s143
      %s146 = sphi 0, %s145
      %s160 = sphi 0, %s146
      %s166 = sphi 0, %s168
      %s169 = sphi 0, %s166
      %s170 = sphi 0, %s169
      %s186 = sphi 0, %s170
    $region4: #{tpu_custom_call.1} parent=1 // loop_header_branch
      %22 = sbr.rel (%p20) target = $region8
    $region5: #{tpu_custom_call.1} parent=1 // loop_body
      %s24 = ssub.s32 %s19, 1
      %s25 = ssub.s32 %s19, 2
      %s32 = sadd.s32 1, %s27
      %p33 = scmp.ge.s32.totalorder %s32, 1
      %s34 = scalar_select %p33, 0, %s32
      %s35 = sadd.s32 1, %s26
      %s36 = scalar_select %p33, %s35, %s26
      %p37 = scmp.ge.s32.totalorder %s36, 2
      %s38 = scalar_select %p37, 0, %s36
      %s39 = ssub.s32 %s26, %s38
      %p40 = scmp.eq.s32.totalorder %s39, 0
      %s42 = sadd.s32 %s41, 1
      %s43 = scalar_select %p40, %s41, %s42
      %p46 = pneg %p40
      %p47 = scmp.eq.s32.totalorder %s19, 1
      %p48 = por %p46, %p47
      %p49 = scmp.ne.s32.totalorder %s41, %s44
      %p50 = scmp.eq.s32.totalorder %s19, 0
      %p51 = por %p49, %p50
      %p52 = scmp.ne.s32.totalorder %s41, %s44
      %p53 = scmp.eq.s32.totalorder %s24, 1
      %p54 = por %p52, %p53
      %p55 = scmp.ne.s32.totalorder %s44, %s45
      %p56 = scmp.eq.s32.totalorder %s24, 0
      %p57 = por %p55, %p56
      %p58 = scmp.ne.s32.totalorder %s44, %s45
      %p59 = scmp.eq.s32.totalorder %s25, 1
      %p60 = por %p58, %p59
      %p62 = scmp.ne.s32.totalorder %s45, %s61
      %p63 = scmp.eq.s32.totalorder %s25, 0
      %p64 = por %p62, %p63
      %s65 = ssub.s32 %s27, %s34
      %p66 = scmp.eq.s32.totalorder %s65, 0
      %s68 = sadd.s32 %s67, 1
      %s69 = scalar_select %p66, %s67, %s68
      %p72 = pneg %p66
      %p73 = scmp.eq.s32.totalorder %s19, 1
      %p74 = por %p72, %p73
      %p75 = scmp.ne.s32.totalorder %s67, %s70
      %p76 = scmp.eq.s32.totalorder %s19, 0
      %p77 = por %p75, %p76
      %p78 = scmp.ne.s32.totalorder %s67, %s70
      %p79 = scmp.eq.s32.totalorder %s24, 1
      %p80 = por %p78, %p79
      %p81 = scmp.ne.s32.totalorder %s70, %s71
      %p82 = scmp.eq.s32.totalorder %s24, 0
      %p83 = por %p81, %p82
      %p84 = scmp.ne.s32.totalorder %s70, %s71
      %p85 = scmp.eq.s32.totalorder %s25, 1
      %p86 = por %p84, %p85
      %p88 = scmp.ne.s32.totalorder %s71, %s87
      %p89 = scmp.eq.s32.totalorder %s25, 0
      %p90 = por %p88, %p89
      %s91 = ssub.s32 %s27, %s34
      %p92 = scmp.eq.s32.totalorder %s91, 0
      %s94 = sadd.s32 %s93, 1
      %s95 = scalar_select %p92, %s93, %s94
      %p98 = pneg %p92
      %p99 = scmp.eq.s32.totalorder %s19, 1
      %p100 = por %p98, %p99
      %p101 = scmp.ne.s32.totalorder %s93, %s96
      %p102 = scmp.eq.s32.totalorder %s19, 0
      %p103 = por %p101, %p102
      %p104 = scmp.ne.s32.totalorder %s93, %s96
      %p105 = scmp.eq.s32.totalorder %s24, 1
      %p106 = por %p104, %p105
      %p107 = scmp.ne.s32.totalorder %s96, %s97
      %p108 = scmp.eq.s32.totalorder %s24, 0
      %p109 = por %p107, %p108
      %p110 = scmp.ne.s32.totalorder %s96, %s97
      %p111 = scmp.eq.s32.totalorder %s25, 1
      %p112 = por %p110, %p111
      %p114 = scmp.ne.s32.totalorder %s97, %s113
      %p115 = scmp.eq.s32.totalorder %s25, 0
      %p116 = por %p114, %p115
      %s117 = ssub.s32 %s27, %s34
      %p118 = scmp.eq.s32.totalorder %s117, 0
      %s120 = sadd.s32 %s119, 1
      %s121 = scalar_select %p118, %s119, %s120
      %p124 = pneg %p118
      %p125 = scmp.eq.s32.totalorder %s19, 1
      %p126 = por %p124, %p125
      %p127 = scmp.ne.s32.totalorder %s119, %s122
      %p128 = scmp.eq.s32.totalorder %s19, 0
      %p129 = por %p127, %p128
      %p130 = scmp.ne.s32.totalorder %s119, %s122
      %p131 = scmp.eq.s32.totalorder %s24, 1
      %p132 = por %p130, %p131
      %p133 = scmp.ne.s32.totalorder %s122, %s123
      %p134 = scmp.eq.s32.totalorder %s24, 0
      %p135 = por %p133, %p134
      %p136 = scmp.ne.s32.totalorder %s122, %s123
      %p137 = scmp.eq.s32.totalorder %s25, 1
      %p138 = por %p136, %p137
      %p140 = scmp.ne.s32.totalorder %s123, %s139
      %p141 = scmp.eq.s32.totalorder %s25, 0
      %p142 = por %p140, %p141
      %s144 = sadd.s32 %s143, 1
      %p147 = scmp.eq.s32.totalorder %s19, 1
      %p148 = scmp.ne.s32.totalorder %s143, %s145
      %p149 = scmp.eq.s32.totalorder %s19, 0
      %p150 = por %p148, %p149
      %p151 = scmp.ne.s32.totalorder %s143, %s145
      %p152 = scmp.eq.s32.totalorder %s24, 1
      %p153 = por %p151, %p152
      %p154 = scmp.ne.s32.totalorder %s145, %s146
      %p155 = scmp.eq.s32.totalorder %s24, 0
      %p156 = por %p154, %p155
      %p157 = scmp.ne.s32.totalorder %s145, %s146
      %p158 = scmp.eq.s32.totalorder %s25, 1
      %p159 = por %p157, %p158
      %p161 = scmp.ne.s32.totalorder %s146, %s160
      %p162 = scmp.eq.s32.totalorder %s25, 0
      %p163 = por %p161, %p162
      %s164 = ssub.s32 %s26, %s38
      %p165 = scmp.eq.s32.totalorder %s164, 0
      %s167 = sadd.s32 %s166, 1
      %s168 = scalar_select %p165, %s166, %s167
      %p171 = pneg %p165
      %p172 = scmp.eq.s32.totalorder %s19, 1
      %p173 = por %p171, %p172
      %p174 = scmp.ne.s32.totalorder %s166, %s169
      %p175 = scmp.eq.s32.totalorder %s19, 0
      %p176 = por %p174, %p175
      %p177 = scmp.ne.s32.totalorder %s166, %s169
      %p178 = scmp.eq.s32.totalorder %s24, 1
      %p179 = por %p177, %p178
      %p180 = scmp.ne.s32.totalorder %s169, %s170
      %p181 = scmp.eq.s32.totalorder %s24, 0
      %p182 = por %p180, %p181
      %p183 = scmp.ne.s32.totalorder %s169, %s170
      %p184 = scmp.eq.s32.totalorder %s25, 1
      %p185 = por %p183, %p184
      %p187 = scmp.ne.s32.totalorder %s170, %s186
      %p188 = scmp.eq.s32.totalorder %s25, 0
      %p189 = por %p187, %p188
      %p190 = scmp.le.s32.totalorder 1, %s19
      %p191 = scmp.lt.s32.totalorder %s19, 3
      %p192 = pnand %p190, %p191
      %p193 = pneg %p192
      // Predicated region
      $region9: #{tpu_custom_call.1} parent=5 // pred_check
        _
      $region10: #{tpu_custom_call.1} parent=5 // pred_check_branch
        %195 = sbr.rel (%p192) target = $region12
      $region11: #{tpu_custom_call.1} parent=5 // pred_region
        %s196 = ssub.s32 %s19, 1
        // Predicated region
        $region13: #{tpu_custom_call.1} parent=11 // pred_check
          %p197 = pneg %p83
        $region14: #{tpu_custom_call.1} parent=11 // pred_check_branch
          %199 = sbr.rel (%p197) target = $region16
        $region15: #{tpu_custom_call.1} parent=11 // pred_region
          %s200 = smul.u32 4, %s29
          %s202 = ssub.s32 8192, 8192
          %203 = vsyncadd [#allocation6], %s202
          %s204 = smul.addr %s200, 64
          %s205 = scalar_lea.hbm %s1, %s204
          %s206 = sshll.u32 [#allocation5], 4
          %s207 = int_to_ptr.vmem [resolvable:$true] %s206
          %212 = dma.hbm_to_vmem [thread:$0]  %s205, 8192, %s207, [#allocation6], 256, 256, 16
        $region16: #{tpu_custom_call.1} parent=11 // pred_fallthru
          _
        // Predicated region
        $region17: #{tpu_custom_call.1} parent=11 // pred_check
          %p213 = pneg %p109
        $region18: #{tpu_custom_call.1} parent=11 // pred_check_branch
          %215 = sbr.rel (%p213) target = $region20
        $region19: #{tpu_custom_call.1} parent=11 // pred_region
          %s216 = smul.u32 4, %s29
          %s218 = ssub.s32 64, 64
          %219 = vsyncadd [#allocation6], %s218
          %s220 = smul.addr %s216, 16
          %s221 = scalar_lea.hbm %s2, %s220
          %s223 = sshll.u32 [#allocation7], 4
          %s224 = int_to_ptr.vmem [resolvable:$true] %s223
          %226 = dma.hbm_to_vmem [thread:$0]  %s221, 64, %s224, [#allocation6]
        $region20: #{tpu_custom_call.1} parent=11 // pred_fallthru
          _
        // Predicated region
        $region21: #{tpu_custom_call.1} parent=11 // pred_check
          %p227 = pneg %p135
        $region22: #{tpu_custom_call.1} parent=11 // pred_check_branch
          %229 = sbr.rel (%p227) target = $region24
        $region23: #{tpu_custom_call.1} parent=11 // pred_region
          %s230 = smul.u32 64, %s29
          %s232 = ssub.s32 8192, 8192
          %233 = vsyncadd [#allocation9], %s232
          %s234 = smul.addr %s230, 2
          %s235 = smul.addr %s234, 64
          %s236 = scalar_lea.hbm %s3, %s235
          %s237 = sshll.u32 [#allocation8], 4
          %s238 = int_to_ptr.vmem [resolvable:$true] %s237
          %243 = dma.hbm_to_vmem [thread:$0]  %s236, 8192, %s238, [#allocation9], 128, 128, 8
        $region24: #{tpu_custom_call.1} parent=11 // pred_fallthru
          _
        // Predicated region
        $region25: #{tpu_custom_call.1} parent=11 // pred_check
          %p244 = pneg %p156
        $region26: #{tpu_custom_call.1} parent=11 // pred_check_branch
          %246 = sbr.rel (%p244) target = $region28
        $region27: #{tpu_custom_call.1} parent=11 // pred_region
          _
        $region28: #{tpu_custom_call.1} parent=11 // pred_fallthru
          _
      $region12: #{tpu_custom_call.1} parent=5 // pred_fallthru
        _
      %p247 = scmp.lt.s32.totalorder %s19, 2
      // Predicated region
      $region29: #{tpu_custom_call.1} parent=5 // pred_check
        %p248 = pneg %p247
      $region30: #{tpu_custom_call.1} parent=5 // pred_check_branch
        %250 = sbr.rel (%p248) target = $region32
      $region31: #{tpu_custom_call.1} parent=5 // pred_region
        // Predicated region
        $region33: #{tpu_custom_call.1} parent=31 // pred_check
          %p251 = pneg %p51
        $region34: #{tpu_custom_call.1} parent=31 // pred_check_branch
          %253 = sbr.rel (%p251) target = $region36
        $region35: #{tpu_custom_call.1} parent=31 // pred_region
          %s254 = sand.u32 %s41, 1
          %s255 = scalar_lea.sflag [#allocation3], %s254
          %s256 = sand.u32 %s41, 1
          %s257 = smul.addr %s256, 256
          %s258 = scalar_lea.vmem [#allocation2], %s257
          %s259 = smul.u32 16, %s26
          %s261 = ssub.s32 4096, 4096
          %262 = vsyncadd %s255, %s261
          %s263 = smul.addr %s259, 2
          %s264 = smul.addr %s263, 128
          %s265 = scalar_lea.hbm %s0, %s264
          %s266 = sshll.u32 %s258, 4
          %s267 = int_to_ptr.vmem [resolvable:$true] %s266
          %272 = dma.hbm_to_vmem [thread:$0]  %s265, 4096, %s267, %s255, 256, 256, 16
        $region36: #{tpu_custom_call.1} parent=31 // pred_fallthru
          _
      $region32: #{tpu_custom_call.1} parent=5 // pred_fallthru
        _
      %p273 = scmp.le.s32.totalorder 1, %s19
      %p274 = scmp.lt.s32.totalorder %s19, 3
      %p275 = pnand %p273, %p274
      %p276 = pneg %p275
      // Predicated region
      $region37: #{tpu_custom_call.1} parent=5 // pred_check
        _
      $region38: #{tpu_custom_call.1} parent=5 // pred_check_branch
        %278 = sbr.rel (%p275) target = $region40
      $region39: #{tpu_custom_call.1} parent=5 // pred_region
        %s279 = ssub.s32 %s19, 1
        %s280 = sand.u32 %s44, 1
        %s281 = scalar_lea.sflag [#allocation3], %s280
        %s282 = sand.u32 %s44, 1
        %s283 = smul.addr %s282, 256
        %s284 = scalar_lea.vmem [#allocation2], %s283
        // Predicated region
        $region41: #{tpu_custom_call.1} parent=39 // pred_check
          %p285 = pneg %p57
        $region42: #{tpu_custom_call.1} parent=39 // pred_check_branch
          %287 = sbr.rel (%p285) target = $region44
        $region43: #{tpu_custom_call.1} parent=39 // pred_region
          %288 = dma.done %s281, 4096
        $region44: #{tpu_custom_call.1} parent=39 // pred_fallthru
          _
        // Predicated region
        $region45: #{tpu_custom_call.1} parent=39 // pred_check
          %p289 = pneg %p83
        $region46: #{tpu_custom_call.1} parent=39 // pred_check_branch
          %291 = sbr.rel (%p289) target = $region48
        $region47: #{tpu_custom_call.1} parent=39 // pred_region
          %292 = dma.done [#allocation6], 8192
        $region48: #{tpu_custom_call.1} parent=39 // pred_fallthru
          _
        // Predicated region
        $region49: #{tpu_custom_call.1} parent=39 // pred_check
          %p293 = pneg %p109
        $region50: #{tpu_custom_call.1} parent=39 // pred_check_branch
          %295 = sbr.rel (%p293) target = $region52
        $region51: #{tpu_custom_call.1} parent=39 // pred_region
          %296 = dma.done [#allocation6], 64
        $region52: #{tpu_custom_call.1} parent=39 // pred_fallthru
          _
        // Predicated region
        $region53: #{tpu_custom_call.1} parent=39 // pred_check
          %p297 = pneg %p135
        $region54: #{tpu_custom_call.1} parent=39 // pred_check_branch
          %299 = sbr.rel (%p297) target = $region56
        $region55: #{tpu_custom_call.1} parent=39 // pred_region
          %300 = dma.done [#allocation9], 8192
        $region56: #{tpu_custom_call.1} parent=39 // pred_fallthru
          _
        %s301 = sand.u32 %s44, 1
        %s302 = scalar_lea.sflag [#allocation3], %s301
        %s303 = sand.u32 %s44, 1
        %s304 = smul.addr %s303, 256
        %s305 = scalar_lea.vmem [#allocation2], %s304
        %p306 = pneg %p57
        %p307 = pneg %p54
        %p308 = pneg %p83
        %p309 = pneg %p80
        %p310 = pneg %p109
        %p311 = pneg %p106
        %p312 = pneg %p135
        %p313 = pneg %p132
        %p314 = pneg %p156
        %p315 = pneg %p153
        %p316 = pneg %p182
        %p317 = pneg %p179
        %s318 = sand.u32 %s169, 1
        %s319 = scalar_lea.sflag [#allocation4], %s318
        %s320 = sand.u32 %s169, 1
        %s321 = smul.addr %s320, 256
        %s322 = scalar_lea.vmem [#allocation10], %s321
        %s323 = smul.u32 16, %s28
        %s324 = smul.u32 4, %s29
        %s325 = smul.u32 4, %s29
        %s326 = smul.u32 64, %s29
        %s327 = smul.u32 16, %s28
        %p328 = scmp.eq.s32.totalorder %s29, 0
        // Predicated region
        $region57: #{tpu_custom_call.1} parent=39 // pred_check
          %p329 = pneg %p328
        $region58: #{tpu_custom_call.1} parent=39 // pred_check_branch
          %331 = sbr.rel (%p329) target = $region60
        $region59: #{tpu_custom_call.1} parent=39 // pred_region
          %332 = vst [vmem:[%s322] sm:$0xff] 0.0
          %333 = vst [vmem:[%s322 + $0x8] sm:$0xff] 0.0
          %334 = vst [vmem:[%s322 + $0x10] sm:$0xff] 0.0
          %335 = vst [vmem:[%s322 + $0x18] sm:$0xff] 0.0
          %336 = vst [vmem:[%s322 + $0x20] sm:$0xff] 0.0
          %337 = vst [vmem:[%s322 + $0x28] sm:$0xff] 0.0
          %338 = vst [vmem:[%s322 + $0x30] sm:$0xff] 0.0
          %339 = vst [vmem:[%s322 + $0x38] sm:$0xff] 0.0
          %340 = vst [vmem:[%s322 + $0x40] sm:$0xff] 0.0
          %341 = vst [vmem:[%s322 + $0x48] sm:$0xff] 0.0
          %342 = vst [vmem:[%s322 + $0x50] sm:$0xff] 0.0
          %343 = vst [vmem:[%s322 + $0x58] sm:$0xff] 0.0
          %344 = vst [vmem:[%s322 + $0x60] sm:$0xff] 0.0
          %345 = vst [vmem:[%s322 + $0x68] sm:$0xff] 0.0
          %346 = vst [vmem:[%s322 + $0x70] sm:$0xff] 0.0
          %347 = vst [vmem:[%s322 + $0x78] sm:$0xff] 0.0
          %348 = vst [vmem:[%s322 + $0x80] sm:$0xff] 0.0
          %349 = vst [vmem:[%s322 + $0x88] sm:$0xff] 0.0
          %350 = vst [vmem:[%s322 + $0x90] sm:$0xff] 0.0
          %351 = vst [vmem:[%s322 + $0x98] sm:$0xff] 0.0
          %352 = vst [vmem:[%s322 + $0xa0] sm:$0xff] 0.0
          %353 = vst [vmem:[%s322 + $0xa8] sm:$0xff] 0.0
          %354 = vst [vmem:[%s322 + $0xb0] sm:$0xff] 0.0
          %355 = vst [vmem:[%s322 + $0xb8] sm:$0xff] 0.0
          %356 = vst [vmem:[%s322 + $0xc0] sm:$0xff] 0.0
          %357 = vst [vmem:[%s322 + $0xc8] sm:$0xff] 0.0
          %358 = vst [vmem:[%s322 + $0xd0] sm:$0xff] 0.0
          %359 = vst [vmem:[%s322 + $0xd8] sm:$0xff] 0.0
          %360 = vst [vmem:[%s322 + $0xe0] sm:$0xff] 0.0
          %361 = vst [vmem:[%s322 + $0xe8] sm:$0xff] 0.0
          %362 = vst [vmem:[%s322 + $0xf0] sm:$0xff] 0.0
          %363 = vst [vmem:[%s322 + $0xf8] sm:$0xff] 0.0
        $region60: #{tpu_custom_call.1} parent=39 // pred_fallthru
          _
        %v364 = vld [vmem:[%s284] sm:$0xff]
        %v365 = vld [vmem:[%s284 + $0x8] sm:$0xff]
        %v366 = vld [vmem:[%s284 + $0x10] sm:$0xff]
        %v367 = vld [vmem:[%s284 + $0x18] sm:$0xff]
        %v368 = vld [vmem:[%s284 + $0x20] sm:$0xff]
        %v369 = vld [vmem:[%s284 + $0x28] sm:$0xff]
        %v370 = vld [vmem:[%s284 + $0x30] sm:$0xff]
        %v371 = vld [vmem:[%s284 + $0x38] sm:$0xff]
        %v372 = vld [vmem:[%s284 + $0x40] sm:$0xff]
        %v373 = vld [vmem:[%s284 + $0x48] sm:$0xff]
        %v374 = vld [vmem:[%s284 + $0x50] sm:$0xff]
        %v375 = vld [vmem:[%s284 + $0x58] sm:$0xff]
        %v376 = vld [vmem:[%s284 + $0x60] sm:$0xff]
        %v377 = vld [vmem:[%s284 + $0x68] sm:$0xff]
        %v378 = vld [vmem:[%s284 + $0x70] sm:$0xff]
        %v379 = vld [vmem:[%s284 + $0x78] sm:$0xff]
        %v380 = vld [vmem:[%s284 + $0x80] sm:$0xff]
        %v381 = vld [vmem:[%s284 + $0x88] sm:$0xff]
        %v382 = vld [vmem:[%s284 + $0x90] sm:$0xff]
        %v383 = vld [vmem:[%s284 + $0x98] sm:$0xff]
        %v384 = vld [vmem:[%s284 + $0xa0] sm:$0xff]
        %v385 = vld [vmem:[%s284 + $0xa8] sm:$0xff]
        %v386 = vld [vmem:[%s284 + $0xb0] sm:$0xff]
        %v387 = vld [vmem:[%s284 + $0xb8] sm:$0xff]
        %v388 = vld [vmem:[%s284 + $0xc0] sm:$0xff]
        %v389 = vld [vmem:[%s284 + $0xc8] sm:$0xff]
        %v390 = vld [vmem:[%s284 + $0xd0] sm:$0xff]
        %v391 = vld [vmem:[%s284 + $0xd8] sm:$0xff]
        %v392 = vld [vmem:[%s284 + $0xe0] sm:$0xff]
        %v393 = vld [vmem:[%s284 + $0xe8] sm:$0xff]
        %v394 = vld [vmem:[%s284 + $0xf0] sm:$0xff]
        %v395 = vld [vmem:[%s284 + $0xf8] sm:$0xff]
        %v396 = vpack.c.bf16 %v366, %v364
        %v397 = vpack.c.bf16 %v367, %v365
        %v398 = vpack.c.bf16 %v370, %v368
        %v399 = vpack.c.bf16 %v371, %v369
        %v400 = vpack.c.bf16 %v374, %v372
        %v401 = vpack.c.bf16 %v375, %v373
        %v402 = vpack.c.bf16 %v378, %v376
        %v403 = vpack.c.bf16 %v379, %v377
        %v404 = vpack.c.bf16 %v382, %v380
        %v405 = vpack.c.bf16 %v383, %v381
        %v406 = vpack.c.bf16 %v386, %v384
        %v407 = vpack.c.bf16 %v387, %v385
        %v408 = vpack.c.bf16 %v390, %v388
        %v409 = vpack.c.bf16 %v391, %v389
        %v410 = vpack.c.bf16 %v394, %v392
        %v411 = vpack.c.bf16 %v395, %v393
        %v412 = vld [vmem:[#allocation5] sm:$0xff]
        %v413 = vld [vmem:[#allocation5 + $0x8] sm:$0xff]
        %v414 = vld [vmem:[#allocation5 + $0x10] sm:$0xff]
        %v415 = vld [vmem:[#allocation5 + $0x18] sm:$0xff]
        %v416 = vld [vmem:[#allocation5 + $0x20] sm:$0xff]
        %v417 = vld [vmem:[#allocation5 + $0x28] sm:$0xff]
        %v418 = vld [vmem:[#allocation5 + $0x30] sm:$0xff]
        %v419 = vld [vmem:[#allocation5 + $0x38] sm:$0xff]
        %v420 = vld [vmem:[#allocation5 + $0x40] sm:$0xff]
        %v421 = vld [vmem:[#allocation5 + $0x48] sm:$0xff]
        %v422 = vld [vmem:[#allocation5 + $0x50] sm:$0xff]
        %v423 = vld [vmem:[#allocation5 + $0x58] sm:$0xff]
        %v424 = vld [vmem:[#allocation5 + $0x60] sm:$0xff]
        %v425 = vld [vmem:[#allocation5 + $0x68] sm:$0xff]
        %v426 = vld [vmem:[#allocation5 + $0x70] sm:$0xff]
        %v427 = vld [vmem:[#allocation5 + $0x78] sm:$0xff]
        %v428 = vld [vmem:[#allocation5 + $0x80] sm:$0xff]
        %v429 = vld [vmem:[#allocation5 + $0x88] sm:$0xff]
        %v430 = vld [vmem:[#allocation5 + $0x90] sm:$0xff]
        %v431 = vld [vmem:[#allocation5 + $0x98] sm:$0xff]
        %v432 = vld [vmem:[#allocation5 + $0xa0] sm:$0xff]
        %v433 = vld [vmem:[#allocation5 + $0xa8] sm:$0xff]
        %v434 = vld [vmem:[#allocation5 + $0xb0] sm:$0xff]
        %v435 = vld [vmem:[#allocation5 + $0xb8] sm:$0xff]
        %v436 = vld [vmem:[#allocation5 + $0xc0] sm:$0xff]
        %v437 = vld [vmem:[#allocation5 + $0xc8] sm:$0xff]
        %v438 = vld [vmem:[#allocation5 + $0xd0] sm:$0xff]
        %v439 = vld [vmem:[#allocation5 + $0xd8] sm:$0xff]
        %v440 = vld [vmem:[#allocation5 + $0xe0] sm:$0xff]
        %v441 = vld [vmem:[#allocation5 + $0xe8] sm:$0xff]
        %v442 = vld [vmem:[#allocation5 + $0xf0] sm:$0xff]
        %v443 = vld [vmem:[#allocation5 + $0xf8] sm:$0xff]
        %v444 = vld [vmem:[#allocation5 + $0x100] sm:$0xff]
        %v445 = vld [vmem:[#allocation5 + $0x108] sm:$0xff]
        %v446 = vld [vmem:[#allocation5 + $0x110] sm:$0xff]
        %v447 = vld [vmem:[#allocation5 + $0x118] sm:$0xff]
        %v448 = vld [vmem:[#allocation5 + $0x120] sm:$0xff]
        %v449 = vld [vmem:[#allocation5 + $0x128] sm:$0xff]
        %v450 = vld [vmem:[#allocation5 + $0x130] sm:$0xff]
        %v451 = vld [vmem:[#allocation5 + $0x138] sm:$0xff]
        %v452 = vld [vmem:[#allocation5 + $0x140] sm:$0xff]
        %v453 = vld [vmem:[#allocation5 + $0x148] sm:$0xff]
        %v454 = vld [vmem:[#allocation5 + $0x150] sm:$0xff]
        %v455 = vld [vmem:[#allocation5 + $0x158] sm:$0xff]
        %v456 = vld [vmem:[#allocation5 + $0x160] sm:$0xff]
        %v457 = vld [vmem:[#allocation5 + $0x168] sm:$0xff]
        %v458 = vld [vmem:[#allocation5 + $0x170] sm:$0xff]
        %v459 = vld [vmem:[#allocation5 + $0x178] sm:$0xff]
        %v460 = vld [vmem:[#allocation5 + $0x180] sm:$0xff]
        %v461 = vld [vmem:[#allocation5 + $0x188] sm:$0xff]
        %v462 = vld [vmem:[#allocation5 + $0x190] sm:$0xff]
        %v463 = vld [vmem:[#allocation5 + $0x198] sm:$0xff]
        %v464 = vld [vmem:[#allocation5 + $0x1a0] sm:$0xff]
        %v465 = vld [vmem:[#allocation5 + $0x1a8] sm:$0xff]
        %v466 = vld [vmem:[#allocation5 + $0x1b0] sm:$0xff]
        %v467 = vld [vmem:[#allocation5 + $0x1b8] sm:$0xff]
        %v468 = vld [vmem:[#allocation5 + $0x1c0] sm:$0xff]
        %v469 = vld [vmem:[#allocation5 + $0x1c8] sm:$0xff]
        %v470 = vld [vmem:[#allocation5 + $0x1d0] sm:$0xff]
        %v471 = vld [vmem:[#allocation5 + $0x1d8] sm:$0xff]
        %v472 = vld [vmem:[#allocation5 + $0x1e0] sm:$0xff]
        %v473 = vld [vmem:[#allocation5 + $0x1e8] sm:$0xff]
        %v474 = vld [vmem:[#allocation5 + $0x1f0] sm:$0xff]
        %v475 = vld [vmem:[#allocation5 + $0x1f8] sm:$0xff]
        %v476 = vld [vmem:[#allocation7] sm:$0xf]
        %v478 = vlaneseq
        %v479 = vshrl.u32 %v478, 7
        %v480 = vsub.s32 0, %v479
        %v481 = vrot.slane %v476, %v480
        %v482 = vlaneseq
        %v483 = vshrl.u32 %v482, 7
        %v484 = vsub.s32 1, %v483
        %v485 = vrot.slane %v476, %v484
        %v486 = vlaneseq
        %v487 = vshrl.u32 %v486, 7
        %v488 = vsub.s32 2, %v487
        %v489 = vrot.slane %v476, %v488
        %v490 = vlaneseq
        %v491 = vshrl.u32 %v490, 7
        %v492 = vsub.s32 3, %v491
        %v493 = vrot.slane %v476, %v492
        %v562 = vunpack.c.l.b16 %v412
        %v563 = vunpack.c.h.b16 %v412
        %v564 = vunpack.c.l.b16 %v413
        %v565 = vunpack.c.h.b16 %v413
        %v566 = vunpack.c.l.b16 %v414
        %v567 = vunpack.c.h.b16 %v414
        %v568 = vunpack.c.l.b16 %v415
        %v569 = vunpack.c.h.b16 %v415
        %v570 = vunpack.c.l.b16 %v416
        %v571 = vunpack.c.h.b16 %v416
        %v572 = vunpack.c.l.b16 %v417
        %v573 = vunpack.c.h.b16 %v417
        %v574 = vunpack.c.l.b16 %v418
        %v575 = vunpack.c.h.b16 %v418
        %v576 = vunpack.c.l.b16 %v419
        %v577 = vunpack.c.h.b16 %v419
        %v578 = vunpack.c.l.b16 %v420
        %v579 = vunpack.c.h.b16 %v420
        %v580 = vunpack.c.l.b16 %v421
        %v581 = vunpack.c.h.b16 %v421
        %v582 = vunpack.c.l.b16 %v422
        %v583 = vunpack.c.h.b16 %v422
        %v584 = vunpack.c.l.b16 %v423
        %v585 = vunpack.c.h.b16 %v423
        %v586 = vunpack.c.l.b16 %v424
        %v587 = vunpack.c.h.b16 %v424
        %v588 = vunpack.c.l.b16 %v425
        %v589 = vunpack.c.h.b16 %v425
        %v590 = vunpack.c.l.b16 %v426
        %v591 = vunpack.c.h.b16 %v426
        %v592 = vunpack.c.l.b16 %v427
        %v593 = vunpack.c.h.b16 %v427
        %v594 = vunpack.c.l.b16 %v428
        %v595 = vunpack.c.h.b16 %v428
        %v596 = vunpack.c.l.b16 %v429
        %v597 = vunpack.c.h.b16 %v429
        %v598 = vunpack.c.l.b16 %v430
        %v599 = vunpack.c.h.b16 %v430
        %v600 = vunpack.c.l.b16 %v431
        %v601 = vunpack.c.h.b16 %v431
        %v602 = vunpack.c.l.b16 %v432
        %v603 = vunpack.c.h.b16 %v432
        %v604 = vunpack.c.l.b16 %v433
        %v605 = vunpack.c.h.b16 %v433
        %v606 = vunpack.c.l.b16 %v434
        %v607 = vunpack.c.h.b16 %v434
        %v608 = vunpack.c.l.b16 %v435
        %v609 = vunpack.c.h.b16 %v435
        %v610 = vunpack.c.l.b16 %v436
        %v611 = vunpack.c.h.b16 %v436
        %v612 = vunpack.c.l.b16 %v437
        %v613 = vunpack.c.h.b16 %v437
        %v614 = vunpack.c.l.b16 %v438
        %v615 = vunpack.c.h.b16 %v438
        %v616 = vunpack.c.l.b16 %v439
        %v617 = vunpack.c.h.b16 %v439
        %v618 = vunpack.c.l.b16 %v440
        %v619 = vunpack.c.h.b16 %v440
        %v620 = vunpack.c.l.b16 %v441
        %v621 = vunpack.c.h.b16 %v441
        %v622 = vunpack.c.l.b16 %v442
        %v623 = vunpack.c.h.b16 %v442
        %v624 = vunpack.c.l.b16 %v443
        %v625 = vunpack.c.h.b16 %v443
        %v626 = vunpack.c.l.b16 %v444
        %v627 = vunpack.c.h.b16 %v444
        %v628 = vunpack.c.l.b16 %v445
        %v629 = vunpack.c.h.b16 %v445
        %v630 = vunpack.c.l.b16 %v446
        %v631 = vunpack.c.h.b16 %v446
        %v632 = vunpack.c.l.b16 %v447
        %v633 = vunpack.c.h.b16 %v447
        %v634 = vunpack.c.l.b16 %v448
        %v635 = vunpack.c.h.b16 %v448
        %v636 = vunpack.c.l.b16 %v449
        %v637 = vunpack.c.h.b16 %v449
        %v638 = vunpack.c.l.b16 %v450
        %v639 = vunpack.c.h.b16 %v450
        %v640 = vunpack.c.l.b16 %v451
        %v641 = vunpack.c.h.b16 %v451
        %v642 = vunpack.c.l.b16 %v452
        %v643 = vunpack.c.h.b16 %v452
        %v644 = vunpack.c.l.b16 %v453
        %v645 = vunpack.c.h.b16 %v453
        %v646 = vunpack.c.l.b16 %v454
        %v647 = vunpack.c.h.b16 %v454
        %v648 = vunpack.c.l.b16 %v455
        %v649 = vunpack.c.h.b16 %v455
        %v650 = vunpack.c.l.b16 %v456
        %v651 = vunpack.c.h.b16 %v456
        %v652 = vunpack.c.l.b16 %v457
        %v653 = vunpack.c.h.b16 %v457
        %v654 = vunpack.c.l.b16 %v458
        %v655 = vunpack.c.h.b16 %v458
        %v656 = vunpack.c.l.b16 %v459
        %v657 = vunpack.c.h.b16 %v459
        %v658 = vunpack.c.l.b16 %v460
        %v659 = vunpack.c.h.b16 %v460
        %v660 = vunpack.c.l.b16 %v461
        %v661 = vunpack.c.h.b16 %v461
        %v662 = vunpack.c.l.b16 %v462
        %v663 = vunpack.c.h.b16 %v462
        %v664 = vunpack.c.l.b16 %v463
        %v665 = vunpack.c.h.b16 %v463
        %v666 = vunpack.c.l.b16 %v464
        %v667 = vunpack.c.h.b16 %v464
        %v668 = vunpack.c.l.b16 %v465
        %v669 = vunpack.c.h.b16 %v465
        %v670 = vunpack.c.l.b16 %v466
        %v671 = vunpack.c.h.b16 %v466
        %v672 = vunpack.c.l.b16 %v467
        %v673 = vunpack.c.h.b16 %v467
        %v674 = vunpack.c.l.b16 %v468
        %v675 = vunpack.c.h.b16 %v468
        %v676 = vunpack.c.l.b16 %v469
        %v677 = vunpack.c.h.b16 %v469
        %v678 = vunpack.c.l.b16 %v470
        %v679 = vunpack.c.h.b16 %v470
        %v680 = vunpack.c.l.b16 %v471
        %v681 = vunpack.c.h.b16 %v471
        %v682 = vunpack.c.l.b16 %v472
        %v683 = vunpack.c.h.b16 %v472
        %v684 = vunpack.c.l.b16 %v473
        %v685 = vunpack.c.h.b16 %v473
        %v686 = vunpack.c.l.b16 %v474
        %v687 = vunpack.c.h.b16 %v474
        %v688 = vunpack.c.l.b16 %v475
        %v689 = vunpack.c.h.b16 %v475
        %v690 = vpack.c.b16 %v566, %v562
        %v691 = vpack.c.b16 %v567, %v563
        %v692 = vpack.c.b16 %v568, %v564
        %v693 = vpack.c.b16 %v569, %v565
        %v694 = vpack.c.b16 %v574, %v570
        %v695 = vpack.c.b16 %v575, %v571
        %v696 = vpack.c.b16 %v576, %v572
        %v697 = vpack.c.b16 %v577, %v573
        %v698 = vpack.c.b16 %v582, %v578
        %v699 = vpack.c.b16 %v583, %v579
        %v700 = vpack.c.b16 %v584, %v580
        %v701 = vpack.c.b16 %v585, %v581
        %v702 = vpack.c.b16 %v590, %v586
        %v703 = vpack.c.b16 %v591, %v587
        %v704 = vpack.c.b16 %v592, %v588
        %v705 = vpack.c.b16 %v593, %v589
        %v706 = vpack.c.b16 %v598, %v594
        %v707 = vpack.c.b16 %v599, %v595
        %v708 = vpack.c.b16 %v600, %v596
        %v709 = vpack.c.b16 %v601, %v597
        %v710 = vpack.c.b16 %v606, %v602
        %v711 = vpack.c.b16 %v607, %v603
        %v712 = vpack.c.b16 %v608, %v604
        %v713 = vpack.c.b16 %v609, %v605
        %v714 = vpack.c.b16 %v614, %v610
        %v715 = vpack.c.b16 %v615, %v611
        %v716 = vpack.c.b16 %v616, %v612
        %v717 = vpack.c.b16 %v617, %v613
        %v718 = vpack.c.b16 %v622, %v618
        %v719 = vpack.c.b16 %v623, %v619
        %v720 = vpack.c.b16 %v624, %v620
        %v721 = vpack.c.b16 %v625, %v621
        %v722 = vpack.c.b16 %v630, %v626
        %v723 = vpack.c.b16 %v631, %v627
        %v724 = vpack.c.b16 %v632, %v628
        %v725 = vpack.c.b16 %v633, %v629
        %v726 = vpack.c.b16 %v638, %v634
        %v727 = vpack.c.b16 %v639, %v635
        %v728 = vpack.c.b16 %v640, %v636
        %v729 = vpack.c.b16 %v641, %v637
        %v730 = vpack.c.b16 %v646, %v642
        %v731 = vpack.c.b16 %v647, %v643
        %v732 = vpack.c.b16 %v648, %v644
        %v733 = vpack.c.b16 %v649, %v645
        %v734 = vpack.c.b16 %v654, %v650
        %v735 = vpack.c.b16 %v655, %v651
        %v736 = vpack.c.b16 %v656, %v652
        %v737 = vpack.c.b16 %v657, %v653
        %v738 = vpack.c.b16 %v662, %v658
        %v739 = vpack.c.b16 %v663, %v659
        %v740 = vpack.c.b16 %v664, %v660
        %v741 = vpack.c.b16 %v665, %v661
        %v742 = vpack.c.b16 %v670, %v666
        %v743 = vpack.c.b16 %v671, %v667
        %v744 = vpack.c.b16 %v672, %v668
        %v745 = vpack.c.b16 %v673, %v669
        %v746 = vpack.c.b16 %v678, %v674
        %v747 = vpack.c.b16 %v679, %v675
        %v748 = vpack.c.b16 %v680, %v676
        %v749 = vpack.c.b16 %v681, %v677
        %v750 = vpack.c.b16 %v686, %v682
        %v751 = vpack.c.b16 %v687, %v683
        %v752 = vpack.c.b16 %v688, %v684
        %v753 = vpack.c.b16 %v689, %v685
        %818 = vmatprep.subr.bf16.mxu0 %v719
        %819 = vmatpush1.bf16.msra.mxu0 %v718
        %820 = vmatprep.subr.bf16.mxu0 %v715
        %821 = vmatpush1.bf16.msra.mxu0 %v714
        %822 = vmatprep.subr.bf16.mxu0 %v711
        %823 = vmatpush1.bf16.msra.mxu0 %v710
        %824 = vmatprep.subr.bf16.mxu0 %v707
        %825 = vmatpush1.bf16.msra.mxu0 %v706
        %826 = vmatprep.subr.bf16.mxu0 %v703
        %827 = vmatpush1.bf16.msra.mxu0 %v702
        %828 = vmatprep.subr.bf16.mxu0 %v699
        %829 = vmatpush1.bf16.msra.mxu0 %v698
        %830 = vmatprep.subr.bf16.mxu0 %v695
        %831 = vmatpush1.bf16.msra.mxu0 %v694
        %832 = vmatprep.subr.bf16.mxu0 %v691
        %833 = vmatpush1.bf16.msra.mxu0 %v690
        %834 = vmatprep.subr.bf16.mxu0 %v751
        %835 = vmatpush2.bf16.msra.mxu0 %v750
        %836 = vmatprep.subr.bf16.mxu0 %v747
        %837 = vmatpush2.bf16.msra.mxu0 %v746
        %838 = vmatprep.subr.bf16.mxu0 %v743
        %839 = vmatpush2.bf16.msra.mxu0 %v742
        %840 = vmatprep.subr.bf16.mxu0 %v739
        %841 = vmatpush2.bf16.msra.mxu0 %v738
        %842 = vmatprep.subr.bf16.mxu0 %v735
        %843 = vmatpush2.bf16.msra.mxu0 %v734
        %844 = vmatprep.subr.bf16.mxu0 %v731
        %845 = vmatpush2.bf16.msra.mxu0 %v730
        %846 = vmatprep.subr.bf16.mxu0 %v727
        %847 = vmatpush2.bf16.msra.mxu0 %v726
        %848 = vmatprep.subr.bf16.mxu0 %v723
        %849 = vmatpush2.bf16.msra.mxu0 %v722
        %850 = vmatprep.mubr.bf16.mxu0 %v397
        %851 = vmatmul.mubr.bf16.gmra.mxu0 %v396
        %v852 = vpop.f32.mrf.mxu0
        %v853 = vadd.f32 %v481, %v852
        %v854 = vpop.f32.mrf.mxu0
        %v855 = vadd.f32 %v485, %v854
        %v856 = vpop.f32.mrf.mxu0
        %v857 = vadd.f32 %v481, %v856
        %v858 = vpop.f32.mrf.mxu0
        %v859 = vadd.f32 %v485, %v858
        %860 = vmatprep.mubr.bf16.mxu0 %v399
        %861 = vmatmul.mubr.bf16.gmra.mxu0 %v398
        %v862 = vpop.f32.mrf.mxu0
        %v863 = vadd.f32 %v481, %v862
        %v864 = vpop.f32.mrf.mxu0
        %v865 = vadd.f32 %v485, %v864
        %v866 = vpop.f32.mrf.mxu0
        %v867 = vadd.f32 %v481, %v866
        %v868 = vpop.f32.mrf.mxu0
        %v869 = vadd.f32 %v485, %v868
        %870 = vmatprep.mubr.bf16.mxu0 %v401
        %871 = vmatmul.mubr.bf16.gmra.mxu0 %v400
        %v872 = vpop.f32.mrf.mxu0
        %v873 = vadd.f32 %v481, %v872
        %v874 = vpop.f32.mrf.mxu0
        %v875 = vadd.f32 %v485, %v874
        %v876 = vpop.f32.mrf.mxu0
        %v877 = vadd.f32 %v481, %v876
        %v878 = vpop.f32.mrf.mxu0
        %v879 = vadd.f32 %v485, %v878
        %880 = vmatprep.mubr.bf16.mxu0 %v403
        %881 = vmatmul.mubr.bf16.gmra.mxu0 %v402
        %v882 = vpop.f32.mrf.mxu0
        %v883 = vadd.f32 %v481, %v882
        %v884 = vpop.f32.mrf.mxu0
        %v885 = vadd.f32 %v485, %v884
        %v886 = vpop.f32.mrf.mxu0
        %v887 = vadd.f32 %v481, %v886
        %v888 = vpop.f32.mrf.mxu0
        %v889 = vadd.f32 %v485, %v888
        %890 = vmatprep.mubr.bf16.mxu0 %v405
        %891 = vmatmul.mubr.bf16.gmra.mxu0 %v404
        %v892 = vpop.f32.mrf.mxu0
        %v893 = vadd.f32 %v481, %v892
        %v894 = vpop.f32.mrf.mxu0
        %v895 = vadd.f32 %v485, %v894
        %v896 = vpop.f32.mrf.mxu0
        %v897 = vadd.f32 %v481, %v896
        %v898 = vpop.f32.mrf.mxu0
        %v899 = vadd.f32 %v485, %v898
        %900 = vmatprep.mubr.bf16.mxu0 %v407
        %901 = vmatmul.mubr.bf16.gmra.mxu0 %v406
        %v902 = vpop.f32.mrf.mxu0
        %v903 = vadd.f32 %v481, %v902
        %v904 = vpop.f32.mrf.mxu0
        %v905 = vadd.f32 %v485, %v904
        %v906 = vpop.f32.mrf.mxu0
        %v907 = vadd.f32 %v481, %v906
        %v908 = vpop.f32.mrf.mxu0
        %v909 = vadd.f32 %v485, %v908
        %910 = vmatprep.mubr.bf16.mxu0 %v409
        %911 = vmatmul.mubr.bf16.gmra.mxu0 %v408
        %v912 = vpop.f32.mrf.mxu0
        %v913 = vadd.f32 %v481, %v912
        %v914 = vpop.f32.mrf.mxu0
        %v915 = vadd.f32 %v485, %v914
        %v916 = vpop.f32.mrf.mxu0
        %v917 = vadd.f32 %v481, %v916
        %v918 = vpop.f32.mrf.mxu0
        %v919 = vadd.f32 %v485, %v918
        %920 = vmatprep.mubr.bf16.mxu0 %v411
        %921 = vmatmul.mubr.bf16.gmra.mxu0 %v410
        %v922 = vpop.f32.mrf.mxu0
        %v923 = vadd.f32 %v481, %v922
        %v924 = vpop.f32.mrf.mxu0
        %v925 = vadd.f32 %v485, %v924
        %v926 = vpop.f32.mrf.mxu0
        %v927 = vadd.f32 %v481, %v926
        %v928 = vpop.f32.mrf.mxu0
        %v929 = vadd.f32 %v485, %v928
        %930 = vdwg.mxu0
        %931 = vmatprep.subr.bf16.mxu0 %v721
        %932 = vmatpush1.bf16.msra.mxu0 %v720
        %933 = vmatprep.subr.bf16.mxu0 %v717
        %934 = vmatpush1.bf16.msra.mxu0 %v716
        %935 = vmatprep.subr.bf16.mxu0 %v713
        %936 = vmatpush1.bf16.msra.mxu0 %v712
        %937 = vmatprep.subr.bf16.mxu0 %v709
        %938 = vmatpush1.bf16.msra.mxu0 %v708
        %939 = vmatprep.subr.bf16.mxu0 %v705
        %940 = vmatpush1.bf16.msra.mxu0 %v704
        %941 = vmatprep.subr.bf16.mxu0 %v701
        %942 = vmatpush1.bf16.msra.mxu0 %v700
        %943 = vmatprep.subr.bf16.mxu0 %v697
        %944 = vmatpush1.bf16.msra.mxu0 %v696
        %945 = vmatprep.subr.bf16.mxu0 %v693
        %946 = vmatpush1.bf16.msra.mxu0 %v692
        %947 = vmatprep.subr.bf16.mxu0 %v753
        %948 = vmatpush2.bf16.msra.mxu0 %v752
        %949 = vmatprep.subr.bf16.mxu0 %v749
        %950 = vmatpush2.bf16.msra.mxu0 %v748
        %951 = vmatprep.subr.bf16.mxu0 %v745
        %952 = vmatpush2.bf16.msra.mxu0 %v744
        %953 = vmatprep.subr.bf16.mxu0 %v741
        %954 = vmatpush2.bf16.msra.mxu0 %v740
        %955 = vmatprep.subr.bf16.mxu0 %v737
        %956 = vmatpush2.bf16.msra.mxu0 %v736
        %957 = vmatprep.subr.bf16.mxu0 %v733
        %958 = vmatpush2.bf16.msra.mxu0 %v732
        %959 = vmatprep.subr.bf16.mxu0 %v729
        %960 = vmatpush2.bf16.msra.mxu0 %v728
        %961 = vmatprep.subr.bf16.mxu0 %v725
        %962 = vmatpush2.bf16.msra.mxu0 %v724
        %963 = vmatprep.mubr.bf16.mxu0 %v397
        %964 = vmatmul.mubr.bf16.gmra.mxu0 %v396
        %v965 = vpop.f32.mrf.mxu0
        %v966 = vadd.f32 %v489, %v965
        %v967 = vpop.f32.mrf.mxu0
        %v968 = vadd.f32 %v493, %v967
        %v969 = vpop.f32.mrf.mxu0
        %v970 = vadd.f32 %v489, %v969
        %v971 = vpop.f32.mrf.mxu0
        %v972 = vadd.f32 %v493, %v971
        %973 = vmatprep.mubr.bf16.mxu0 %v399
        %974 = vmatmul.mubr.bf16.gmra.mxu0 %v398
        %v975 = vpop.f32.mrf.mxu0
        %v976 = vadd.f32 %v489, %v975
        %v977 = vpop.f32.mrf.mxu0
        %v978 = vadd.f32 %v493, %v977
        %v979 = vpop.f32.mrf.mxu0
        %v980 = vadd.f32 %v489, %v979
        %v981 = vpop.f32.mrf.mxu0
        %v982 = vadd.f32 %v493, %v981
        %983 = vmatprep.mubr.bf16.mxu0 %v401
        %984 = vmatmul.mubr.bf16.gmra.mxu0 %v400
        %v985 = vpop.f32.mrf.mxu0
        %v986 = vadd.f32 %v489, %v985
        %v987 = vpop.f32.mrf.mxu0
        %v988 = vadd.f32 %v493, %v987
        %v989 = vpop.f32.mrf.mxu0
        %v990 = vadd.f32 %v489, %v989
        %v991 = vpop.f32.mrf.mxu0
        %v992 = vadd.f32 %v493, %v991
        %993 = vmatprep.mubr.bf16.mxu0 %v403
        %994 = vmatmul.mubr.bf16.gmra.mxu0 %v402
        %v995 = vpop.f32.mrf.mxu0
        %v996 = vadd.f32 %v489, %v995
        %v997 = vpop.f32.mrf.mxu0
        %v998 = vadd.f32 %v493, %v997
        %v999 = vpop.f32.mrf.mxu0
        %v1000 = vadd.f32 %v489, %v999
        %v1001 = vpop.f32.mrf.mxu0
        %v1002 = vadd.f32 %v493, %v1001
        %1003 = vmatprep.mubr.bf16.mxu0 %v405
        %1004 = vmatmul.mubr.bf16.gmra.mxu0 %v404
        %v1005 = vpop.f32.mrf.mxu0
        %v1006 = vadd.f32 %v489, %v1005
        %v1007 = vpop.f32.mrf.mxu0
        %v1008 = vadd.f32 %v493, %v1007
        %v1009 = vpop.f32.mrf.mxu0
        %v1010 = vadd.f32 %v489, %v1009
        %v1011 = vpop.f32.mrf.mxu0
        %v1012 = vadd.f32 %v493, %v1011
        %1013 = vmatprep.mubr.bf16.mxu0 %v407
        %1014 = vmatmul.mubr.bf16.gmra.mxu0 %v406
        %v1015 = vpop.f32.mrf.mxu0
        %v1016 = vadd.f32 %v489, %v1015
        %v1017 = vpop.f32.mrf.mxu0
        %v1018 = vadd.f32 %v493, %v1017
        %v1019 = vpop.f32.mrf.mxu0
        %v1020 = vadd.f32 %v489, %v1019
        %v1021 = vpop.f32.mrf.mxu0
        %v1022 = vadd.f32 %v493, %v1021
        %1023 = vmatprep.mubr.bf16.mxu0 %v409
        %1024 = vmatmul.mubr.bf16.gmra.mxu0 %v408
        %v1025 = vpop.f32.mrf.mxu0
        %v1026 = vadd.f32 %v489, %v1025
        %v1027 = vpop.f32.mrf.mxu0
        %v1028 = vadd.f32 %v493, %v1027
        %v1029 = vpop.f32.mrf.mxu0
        %v1030 = vadd.f32 %v489, %v1029
        %v1031 = vpop.f32.mrf.mxu0
        %v1032 = vadd.f32 %v493, %v1031
        %1033 = vmatprep.mubr.bf16.mxu0 %v411
        %1034 = vmatmul.mubr.bf16.gmra.mxu0 %v410
        %v1035 = vpop.f32.mrf.mxu0
        %v1036 = vadd.f32 %v489, %v1035
        %v1037 = vpop.f32.mrf.mxu0
        %v1038 = vadd.f32 %v493, %v1037
        %v1039 = vpop.f32.mrf.mxu0
        %v1040 = vadd.f32 %v489, %v1039
        %v1041 = vpop.f32.mrf.mxu0
        %v1042 = vadd.f32 %v493, %v1041
        %1043 = vdwg.mxu0
        %v1044 = vmul.f32 %v853, 0.5
        %v1045 = vmul.f32 %v855, 0.5
        %v1046 = vmul.f32 %v966, 0.5
        %v1047 = vmul.f32 %v968, 0.5
        %v1048 = vmul.f32 %v857, 0.5
        %v1049 = vmul.f32 %v859, 0.5
        %v1050 = vmul.f32 %v970, 0.5
        %v1051 = vmul.f32 %v972, 0.5
        %v1052 = vmul.f32 %v863, 0.5
        %v1053 = vmul.f32 %v865, 0.5
        %v1054 = vmul.f32 %v976, 0.5
        %v1055 = vmul.f32 %v978, 0.5
        %v1056 = vmul.f32 %v867, 0.5
        %v1057 = vmul.f32 %v869, 0.5
        %v1058 = vmul.f32 %v980, 0.5
        %v1059 = vmul.f32 %v982, 0.5
        %v1060 = vmul.f32 %v873, 0.5
        %v1061 = vmul.f32 %v875, 0.5
        %v1062 = vmul.f32 %v986, 0.5
        %v1063 = vmul.f32 %v988, 0.5
        %v1064 = vmul.f32 %v877, 0.5
        %v1065 = vmul.f32 %v879, 0.5
        %v1066 = vmul.f32 %v990, 0.5
        %v1067 = vmul.f32 %v992, 0.5
        %v1068 = vmul.f32 %v883, 0.5
        %v1069 = vmul.f32 %v885, 0.5
        %v1070 = vmul.f32 %v996, 0.5
        %v1071 = vmul.f32 %v998, 0.5
        %v1072 = vmul.f32 %v887, 0.5
        %v1073 = vmul.f32 %v889, 0.5
        %v1074 = vmul.f32 %v1000, 0.5
        %v1075 = vmul.f32 %v1002, 0.5
        %v1076 = vmul.f32 %v893, 0.5
        %v1077 = vmul.f32 %v895, 0.5
        %v1078 = vmul.f32 %v1006, 0.5
        %v1079 = vmul.f32 %v1008, 0.5
        %v1080 = vmul.f32 %v897, 0.5
        %v1081 = vmul.f32 %v899, 0.5
        %v1082 = vmul.f32 %v1010, 0.5
        %v1083 = vmul.f32 %v1012, 0.5
        %v1084 = vmul.f32 %v903, 0.5
        %v1085 = vmul.f32 %v905, 0.5
        %v1086 = vmul.f32 %v1016, 0.5
        %v1087 = vmul.f32 %v1018, 0.5
        %v1088 = vmul.f32 %v907, 0.5
        %v1089 = vmul.f32 %v909, 0.5
        %v1090 = vmul.f32 %v1020, 0.5
        %v1091 = vmul.f32 %v1022, 0.5
        %v1092 = vmul.f32 %v913, 0.5
        %v1093 = vmul.f32 %v915, 0.5
        %v1094 = vmul.f32 %v1026, 0.5
        %v1095 = vmul.f32 %v1028, 0.5
        %v1096 = vmul.f32 %v917, 0.5
        %v1097 = vmul.f32 %v919, 0.5
        %v1098 = vmul.f32 %v1030, 0.5
        %v1099 = vmul.f32 %v1032, 0.5
        %v1100 = vmul.f32 %v923, 0.5
        %v1101 = vmul.f32 %v925, 0.5
        %v1102 = vmul.f32 %v1036, 0.5
        %v1103 = vmul.f32 %v1038, 0.5
        %v1104 = vmul.f32 %v927, 0.5
        %v1105 = vmul.f32 %v929, 0.5
        %v1106 = vmul.f32 %v1040, 0.5
        %v1107 = vmul.f32 %v1042, 0.5
        %v1108 = vmul.f32 %v853, 0.044715
        %v1109 = vmul.f32 %v855, 0.044715
        %v1110 = vmul.f32 %v966, 0.044715
        %v1111 = vmul.f32 %v968, 0.044715
        %v1112 = vmul.f32 %v857, 0.044715
        %v1113 = vmul.f32 %v859, 0.044715
        %v1114 = vmul.f32 %v970, 0.044715
        %v1115 = vmul.f32 %v972, 0.044715
        %v1116 = vmul.f32 %v863, 0.044715
        %v1117 = vmul.f32 %v865, 0.044715
        %v1118 = vmul.f32 %v976, 0.044715
        %v1119 = vmul.f32 %v978, 0.044715
        %v1120 = vmul.f32 %v867, 0.044715
        %v1121 = vmul.f32 %v869, 0.044715
        %v1122 = vmul.f32 %v980, 0.044715
        %v1123 = vmul.f32 %v982, 0.044715
        %v1124 = vmul.f32 %v873, 0.044715
        %v1125 = vmul.f32 %v875, 0.044715
        %v1126 = vmul.f32 %v986, 0.044715
        %v1127 = vmul.f32 %v988, 0.044715
        %v1128 = vmul.f32 %v877, 0.044715
        %v1129 = vmul.f32 %v879, 0.044715
        %v1130 = vmul.f32 %v990, 0.044715
        %v1131 = vmul.f32 %v992, 0.044715
        %v1132 = vmul.f32 %v883, 0.044715
        %v1133 = vmul.f32 %v885, 0.044715
        %v1134 = vmul.f32 %v996, 0.044715
        %v1135 = vmul.f32 %v998, 0.044715
        %v1136 = vmul.f32 %v887, 0.044715
        %v1137 = vmul.f32 %v889, 0.044715
        %v1138 = vmul.f32 %v1000, 0.044715
        %v1139 = vmul.f32 %v1002, 0.044715
        %v1140 = vmul.f32 %v893, 0.044715
        %v1141 = vmul.f32 %v895, 0.044715
        %v1142 = vmul.f32 %v1006, 0.044715
        %v1143 = vmul.f32 %v1008, 0.044715
        %v1144 = vmul.f32 %v897, 0.044715
        %v1145 = vmul.f32 %v899, 0.044715
        %v1146 = vmul.f32 %v1010, 0.044715
        %v1147 = vmul.f32 %v1012, 0.044715
        %v1148 = vmul.f32 %v903, 0.044715
        %v1149 = vmul.f32 %v905, 0.044715
        %v1150 = vmul.f32 %v1016, 0.044715
        %v1151 = vmul.f32 %v1018, 0.044715
        %v1152 = vmul.f32 %v907, 0.044715
        %v1153 = vmul.f32 %v909, 0.044715
        %v1154 = vmul.f32 %v1020, 0.044715
        %v1155 = vmul.f32 %v1022, 0.044715
        %v1156 = vmul.f32 %v913, 0.044715
        %v1157 = vmul.f32 %v915, 0.044715
        %v1158 = vmul.f32 %v1026, 0.044715
        %v1159 = vmul.f32 %v1028, 0.044715
        %v1160 = vmul.f32 %v917, 0.044715
        %v1161 = vmul.f32 %v919, 0.044715
        %v1162 = vmul.f32 %v1030, 0.044715
        %v1163 = vmul.f32 %v1032, 0.044715
        %v1164 = vmul.f32 %v923, 0.044715
        %v1165 = vmul.f32 %v925, 0.044715
        %v1166 = vmul.f32 %v1036, 0.044715
        %v1167 = vmul.f32 %v1038, 0.044715
        %v1168 = vmul.f32 %v927, 0.044715
        %v1169 = vmul.f32 %v929, 0.044715
        %v1170 = vmul.f32 %v1040, 0.044715
        %v1171 = vmul.f32 %v1042, 0.044715
        %v1172 = vmul.f32 %v1108, %v853
        %v1173 = vmul.f32 %v1109, %v855
        %v1174 = vmul.f32 %v1110, %v966
        %v1175 = vmul.f32 %v1111, %v968
        %v1176 = vmul.f32 %v1112, %v857
        %v1177 = vmul.f32 %v1113, %v859
        %v1178 = vmul.f32 %v1114, %v970
        %v1179 = vmul.f32 %v1115, %v972
        %v1180 = vmul.f32 %v1116, %v863
        %v1181 = vmul.f32 %v1117, %v865
        %v1182 = vmul.f32 %v1118, %v976
        %v1183 = vmul.f32 %v1119, %v978
        %v1184 = vmul.f32 %v1120, %v867
        %v1185 = vmul.f32 %v1121, %v869
        %v1186 = vmul.f32 %v1122, %v980
        %v1187 = vmul.f32 %v1123, %v982
        %v1188 = vmul.f32 %v1124, %v873
        %v1189 = vmul.f32 %v1125, %v875
        %v1190 = vmul.f32 %v1126, %v986
        %v1191 = vmul.f32 %v1127, %v988
        %v1192 = vmul.f32 %v1128, %v877
        %v1193 = vmul.f32 %v1129, %v879
        %v1194 = vmul.f32 %v1130, %v990
        %v1195 = vmul.f32 %v1131, %v992
        %v1196 = vmul.f32 %v1132, %v883
        %v1197 = vmul.f32 %v1133, %v885
        %v1198 = vmul.f32 %v1134, %v996
        %v1199 = vmul.f32 %v1135, %v998
        %v1200 = vmul.f32 %v1136, %v887
        %v1201 = vmul.f32 %v1137, %v889
        %v1202 = vmul.f32 %v1138, %v1000
        %v1203 = vmul.f32 %v1139, %v1002
        %v1204 = vmul.f32 %v1140, %v893
        %v1205 = vmul.f32 %v1141, %v895
        %v1206 = vmul.f32 %v1142, %v1006
        %v1207 = vmul.f32 %v1143, %v1008
        %v1208 = vmul.f32 %v1144, %v897
        %v1209 = vmul.f32 %v1145, %v899
        %v1210 = vmul.f32 %v1146, %v1010
        %v1211 = vmul.f32 %v1147, %v1012
        %v1212 = vmul.f32 %v1148, %v903
        %v1213 = vmul.f32 %v1149, %v905
        %v1214 = vmul.f32 %v1150, %v1016
        %v1215 = vmul.f32 %v1151, %v1018
        %v1216 = vmul.f32 %v1152, %v907
        %v1217 = vmul.f32 %v1153, %v909
        %v1218 = vmul.f32 %v1154, %v1020
        %v1219 = vmul.f32 %v1155, %v1022
        %v1220 = vmul.f32 %v1156, %v913
        %v1221 = vmul.f32 %v1157, %v915
        %v1222 = vmul.f32 %v1158, %v1026
        %v1223 = vmul.f32 %v1159, %v1028
        %v1224 = vmul.f32 %v1160, %v917
        %v1225 = vmul.f32 %v1161, %v919
        %v1226 = vmul.f32 %v1162, %v1030
        %v1227 = vmul.f32 %v1163, %v1032
        %v1228 = vmul.f32 %v1164, %v923
        %v1229 = vmul.f32 %v1165, %v925
        %v1230 = vmul.f32 %v1166, %v1036
        %v1231 = vmul.f32 %v1167, %v1038
        %v1232 = vmul.f32 %v1168, %v927
        %v1233 = vmul.f32 %v1169, %v929
        %v1234 = vmul.f32 %v1170, %v1040
        %v1235 = vmul.f32 %v1171, %v1042
        %v1236 = vmul.f32 %v1172, %v853
        %v1237 = vmul.f32 %v1173, %v855
        %v1238 = vmul.f32 %v1174, %v966
        %v1239 = vmul.f32 %v1175, %v968
        %v1240 = vmul.f32 %v1176, %v857
        %v1241 = vmul.f32 %v1177, %v859
        %v1242 = vmul.f32 %v1178, %v970
        %v1243 = vmul.f32 %v1179, %v972
        %v1244 = vmul.f32 %v1180, %v863
        %v1245 = vmul.f32 %v1181, %v865
        %v1246 = vmul.f32 %v1182, %v976
        %v1247 = vmul.f32 %v1183, %v978
        %v1248 = vmul.f32 %v1184, %v867
        %v1249 = vmul.f32 %v1185, %v869
        %v1250 = vmul.f32 %v1186, %v980
        %v1251 = vmul.f32 %v1187, %v982
        %v1252 = vmul.f32 %v1188, %v873
        %v1253 = vmul.f32 %v1189, %v875
        %v1254 = vmul.f32 %v1190, %v986
        %v1255 = vmul.f32 %v1191, %v988
        %v1256 = vmul.f32 %v1192, %v877
        %v1257 = vmul.f32 %v1193, %v879
        %v1258 = vmul.f32 %v1194, %v990
        %v1259 = vmul.f32 %v1195, %v992
        %v1260 = vmul.f32 %v1196, %v883
        %v1261 = vmul.f32 %v1197, %v885
        %v1262 = vmul.f32 %v1198, %v996
        %v1263 = vmul.f32 %v1199, %v998
        %v1264 = vmul.f32 %v1200, %v887
        %v1265 = vmul.f32 %v1201, %v889
        %v1266 = vmul.f32 %v1202, %v1000
        %v1267 = vmul.f32 %v1203, %v1002
        %v1268 = vmul.f32 %v1204, %v893
        %v1269 = vmul.f32 %v1205, %v895
        %v1270 = vmul.f32 %v1206, %v1006
        %v1271 = vmul.f32 %v1207, %v1008
        %v1272 = vmul.f32 %v1208, %v897
        %v1273 = vmul.f32 %v1209, %v899
        %v1274 = vmul.f32 %v1210, %v1010
        %v1275 = vmul.f32 %v1211, %v1012
        %v1276 = vmul.f32 %v1212, %v903
        %v1277 = vmul.f32 %v1213, %v905
        %v1278 = vmul.f32 %v1214, %v1016
        %v1279 = vmul.f32 %v1215, %v1018
        %v1280 = vmul.f32 %v1216, %v907
        %v1281 = vmul.f32 %v1217, %v909
        %v1282 = vmul.f32 %v1218, %v1020
        %v1283 = vmul.f32 %v1219, %v1022
        %v1284 = vmul.f32 %v1220, %v913
        %v1285 = vmul.f32 %v1221, %v915
        %v1286 = vmul.f32 %v1222, %v1026
        %v1287 = vmul.f32 %v1223, %v1028
        %v1288 = vmul.f32 %v1224, %v917
        %v1289 = vmul.f32 %v1225, %v919
        %v1290 = vmul.f32 %v1226, %v1030
        %v1291 = vmul.f32 %v1227, %v1032
        %v1292 = vmul.f32 %v1228, %v923
        %v1293 = vmul.f32 %v1229, %v925
        %v1294 = vmul.f32 %v1230, %v1036
        %v1295 = vmul.f32 %v1231, %v1038
        %v1296 = vmul.f32 %v1232, %v927
        %v1297 = vmul.f32 %v1233, %v929
        %v1298 = vmul.f32 %v1234, %v1040
        %v1299 = vmul.f32 %v1235, %v1042
        %v1300 = vadd.f32 %v853, %v1236
        %v1301 = vadd.f32 %v855, %v1237
        %v1302 = vadd.f32 %v966, %v1238
        %v1303 = vadd.f32 %v968, %v1239
        %v1304 = vadd.f32 %v857, %v1240
        %v1305 = vadd.f32 %v859, %v1241
        %v1306 = vadd.f32 %v970, %v1242
        %v1307 = vadd.f32 %v972, %v1243
        %v1308 = vadd.f32 %v863, %v1244
        %v1309 = vadd.f32 %v865, %v1245
        %v1310 = vadd.f32 %v976, %v1246
        %v1311 = vadd.f32 %v978, %v1247
        %v1312 = vadd.f32 %v867, %v1248
        %v1313 = vadd.f32 %v869, %v1249
        %v1314 = vadd.f32 %v980, %v1250
        %v1315 = vadd.f32 %v982, %v1251
        %v1316 = vadd.f32 %v873, %v1252
        %v1317 = vadd.f32 %v875, %v1253
        %v1318 = vadd.f32 %v986, %v1254
        %v1319 = vadd.f32 %v988, %v1255
        %v1320 = vadd.f32 %v877, %v1256
        %v1321 = vadd.f32 %v879, %v1257
        %v1322 = vadd.f32 %v990, %v1258
        %v1323 = vadd.f32 %v992, %v1259
        %v1324 = vadd.f32 %v883, %v1260
        %v1325 = vadd.f32 %v885, %v1261
        %v1326 = vadd.f32 %v996, %v1262
        %v1327 = vadd.f32 %v998, %v1263
        %v1328 = vadd.f32 %v887, %v1264
        %v1329 = vadd.f32 %v889, %v1265
        %v1330 = vadd.f32 %v1000, %v1266
        %v1331 = vadd.f32 %v1002, %v1267
        %v1332 = vadd.f32 %v893, %v1268
        %v1333 = vadd.f32 %v895, %v1269
        %v1334 = vadd.f32 %v1006, %v1270
        %v1335 = vadd.f32 %v1008, %v1271
        %v1336 = vadd.f32 %v897, %v1272
        %v1337 = vadd.f32 %v899, %v1273
        %v1338 = vadd.f32 %v1010, %v1274
        %v1339 = vadd.f32 %v1012, %v1275
        %v1340 = vadd.f32 %v903, %v1276
        %v1341 = vadd.f32 %v905, %v1277
        %v1342 = vadd.f32 %v1016, %v1278
        %v1343 = vadd.f32 %v1018, %v1279
        %v1344 = vadd.f32 %v907, %v1280
        %v1345 = vadd.f32 %v909, %v1281
        %v1346 = vadd.f32 %v1020, %v1282
        %v1347 = vadd.f32 %v1022, %v1283
        %v1348 = vadd.f32 %v913, %v1284
        %v1349 = vadd.f32 %v915, %v1285
        %v1350 = vadd.f32 %v1026, %v1286
        %v1351 = vadd.f32 %v1028, %v1287
        %v1352 = vadd.f32 %v917, %v1288
        %v1353 = vadd.f32 %v919, %v1289
        %v1354 = vadd.f32 %v1030, %v1290
        %v1355 = vadd.f32 %v1032, %v1291
        %v1356 = vadd.f32 %v923, %v1292
        %v1357 = vadd.f32 %v925, %v1293
        %v1358 = vadd.f32 %v1036, %v1294
        %v1359 = vadd.f32 %v1038, %v1295
        %v1360 = vadd.f32 %v927, %v1296
        %v1361 = vadd.f32 %v929, %v1297
        %v1362 = vadd.f32 %v1040, %v1298
        %v1363 = vadd.f32 %v1042, %v1299
        %v1364 = vmul.f32 %v1300, 0.7978846
        %v1365 = vmul.f32 %v1301, 0.7978846
        %v1366 = vmul.f32 %v1302, 0.7978846
        %v1367 = vmul.f32 %v1303, 0.7978846
        %v1368 = vmul.f32 %v1304, 0.7978846
        %v1369 = vmul.f32 %v1305, 0.7978846
        %v1370 = vmul.f32 %v1306, 0.7978846
        %v1371 = vmul.f32 %v1307, 0.7978846
        %v1372 = vmul.f32 %v1308, 0.7978846
        %v1373 = vmul.f32 %v1309, 0.7978846
        %v1374 = vmul.f32 %v1310, 0.7978846
        %v1375 = vmul.f32 %v1311, 0.7978846
        %v1376 = vmul.f32 %v1312, 0.7978846
        %v1377 = vmul.f32 %v1313, 0.7978846
        %v1378 = vmul.f32 %v1314, 0.7978846
        %v1379 = vmul.f32 %v1315, 0.7978846
        %v1380 = vmul.f32 %v1316, 0.7978846
        %v1381 = vmul.f32 %v1317, 0.7978846
        %v1382 = vmul.f32 %v1318, 0.7978846
        %v1383 = vmul.f32 %v1319, 0.7978846
        %v1384 = vmul.f32 %v1320, 0.7978846
        %v1385 = vmul.f32 %v1321, 0.7978846
        %v1386 = vmul.f32 %v1322, 0.7978846
        %v1387 = vmul.f32 %v1323, 0.7978846
        %v1388 = vmul.f32 %v1324, 0.7978846
        %v1389 = vmul.f32 %v1325, 0.7978846
        %v1390 = vmul.f32 %v1326, 0.7978846
        %v1391 = vmul.f32 %v1327, 0.7978846
        %v1392 = vmul.f32 %v1328, 0.7978846
        %v1393 = vmul.f32 %v1329, 0.7978846
        %v1394 = vmul.f32 %v1330, 0.7978846
        %v1395 = vmul.f32 %v1331, 0.7978846
        %v1396 = vmul.f32 %v1332, 0.7978846
        %v1397 = vmul.f32 %v1333, 0.7978846
        %v1398 = vmul.f32 %v1334, 0.7978846
        %v1399 = vmul.f32 %v1335, 0.7978846
        %v1400 = vmul.f32 %v1336, 0.7978846
        %v1401 = vmul.f32 %v1337, 0.7978846
        %v1402 = vmul.f32 %v1338, 0.7978846
        %v1403 = vmul.f32 %v1339, 0.7978846
        %v1404 = vmul.f32 %v1340, 0.7978846
        %v1405 = vmul.f32 %v1341, 0.7978846
        %v1406 = vmul.f32 %v1342, 0.7978846
        %v1407 = vmul.f32 %v1343, 0.7978846
        %v1408 = vmul.f32 %v1344, 0.7978846
        %v1409 = vmul.f32 %v1345, 0.7978846
        %v1410 = vmul.f32 %v1346, 0.7978846
        %v1411 = vmul.f32 %v1347, 0.7978846
        %v1412 = vmul.f32 %v1348, 0.7978846
        %v1413 = vmul.f32 %v1349, 0.7978846
        %v1414 = vmul.f32 %v1350, 0.7978846
        %v1415 = vmul.f32 %v1351, 0.7978846
        %v1416 = vmul.f32 %v1352, 0.7978846
        %v1417 = vmul.f32 %v1353, 0.7978846
        %v1418 = vmul.f32 %v1354, 0.7978846
        %v1419 = vmul.f32 %v1355, 0.7978846
        %v1420 = vmul.f32 %v1356, 0.7978846
        %v1421 = vmul.f32 %v1357, 0.7978846
        %v1422 = vmul.f32 %v1358, 0.7978846
        %v1423 = vmul.f32 %v1359, 0.7978846
        %v1424 = vmul.f32 %v1360, 0.7978846
        %v1425 = vmul.f32 %v1361, 0.7978846
        %v1426 = vmul.f32 %v1362, 0.7978846
        %v1427 = vmul.f32 %v1363, 0.7978846
        %v1428 = vtanh.pop %v1364
        %v1429 = vtanh.pop %v1365
        %v1430 = vtanh.pop %v1366
        %v1431 = vtanh.pop %v1367
        %v1432 = vtanh.pop %v1368
        %v1433 = vtanh.pop %v1369
        %v1434 = vtanh.pop %v1370
        %v1435 = vtanh.pop %v1371
        %v1436 = vtanh.pop %v1372
        %v1437 = vtanh.pop %v1373
        %v1438 = vtanh.pop %v1374
        %v1439 = vtanh.pop %v1375
        %v1440 = vtanh.pop %v1376
        %v1441 = vtanh.pop %v1377
        %v1442 = vtanh.pop %v1378
        %v1443 = vtanh.pop %v1379
        %v1444 = vtanh.pop %v1380
        %v1445 = vtanh.pop %v1381
        %v1446 = vtanh.pop %v1382
        %v1447 = vtanh.pop %v1383
        %v1448 = vtanh.pop %v1384
        %v1449 = vtanh.pop %v1385
        %v1450 = vtanh.pop %v1386
        %v1451 = vtanh.pop %v1387
        %v1452 = vtanh.pop %v1388
        %v1453 = vtanh.pop %v1389
        %v1454 = vtanh.pop %v1390
        %v1455 = vtanh.pop %v1391
        %v1456 = vtanh.pop %v1392
        %v1457 = vtanh.pop %v1393
        %v1458 = vtanh.pop %v1394
        %v1459 = vtanh.pop %v1395
        %v1460 = vtanh.pop %v1396
        %v1461 = vtanh.pop %v1397
        %v1462 = vtanh.pop %v1398
        %v1463 = vtanh.pop %v1399
        %v1464 = vtanh.pop %v1400
        %v1465 = vtanh.pop %v1401
        %v1466 = vtanh.pop %v1402
        %v1467 = vtanh.pop %v1403
        %v1468 = vtanh.pop %v1404
        %v1469 = vtanh.pop %v1405
        %v1470 = vtanh.pop %v1406
        %v1471 = vtanh.pop %v1407
        %v1472 = vtanh.pop %v1408
        %v1473 = vtanh.pop %v1409
        %v1474 = vtanh.pop %v1410
        %v1475 = vtanh.pop %v1411
        %v1476 = vtanh.pop %v1412
        %v1477 = vtanh.pop %v1413
        %v1478 = vtanh.pop %v1414
        %v1479 = vtanh.pop %v1415
        %v1480 = vtanh.pop %v1416
        %v1481 = vtanh.pop %v1417
        %v1482 = vtanh.pop %v1418
        %v1483 = vtanh.pop %v1419
        %v1484 = vtanh.pop %v1420
        %v1485 = vtanh.pop %v1421
        %v1486 = vtanh.pop %v1422
        %v1487 = vtanh.pop %v1423
        %v1488 = vtanh.pop %v1424
        %v1489 = vtanh.pop %v1425
        %v1490 = vtanh.pop %v1426
        %v1491 = vtanh.pop %v1427
        %v1492 = vadd.f32 %v1428, 1.0
        %v1493 = vadd.f32 %v1429, 1.0
        %v1494 = vadd.f32 %v1430, 1.0
        %v1495 = vadd.f32 %v1431, 1.0
        %v1496 = vadd.f32 %v1432, 1.0
        %v1497 = vadd.f32 %v1433, 1.0
        %v1498 = vadd.f32 %v1434, 1.0
        %v1499 = vadd.f32 %v1435, 1.0
        %v1500 = vadd.f32 %v1436, 1.0
        %v1501 = vadd.f32 %v1437, 1.0
        %v1502 = vadd.f32 %v1438, 1.0
        %v1503 = vadd.f32 %v1439, 1.0
        %v1504 = vadd.f32 %v1440, 1.0
        %v1505 = vadd.f32 %v1441, 1.0
        %v1506 = vadd.f32 %v1442, 1.0
        %v1507 = vadd.f32 %v1443, 1.0
        %v1508 = vadd.f32 %v1444, 1.0
        %v1509 = vadd.f32 %v1445, 1.0
        %v1510 = vadd.f32 %v1446, 1.0
        %v1511 = vadd.f32 %v1447, 1.0
        %v1512 = vadd.f32 %v1448, 1.0
        %v1513 = vadd.f32 %v1449, 1.0
        %v1514 = vadd.f32 %v1450, 1.0
        %v1515 = vadd.f32 %v1451, 1.0
        %v1516 = vadd.f32 %v1452, 1.0
        %v1517 = vadd.f32 %v1453, 1.0
        %v1518 = vadd.f32 %v1454, 1.0
        %v1519 = vadd.f32 %v1455, 1.0
        %v1520 = vadd.f32 %v1456, 1.0
        %v1521 = vadd.f32 %v1457, 1.0
        %v1522 = vadd.f32 %v1458, 1.0
        %v1523 = vadd.f32 %v1459, 1.0
        %v1524 = vadd.f32 %v1460, 1.0
        %v1525 = vadd.f32 %v1461, 1.0
        %v1526 = vadd.f32 %v1462, 1.0
        %v1527 = vadd.f32 %v1463, 1.0
        %v1528 = vadd.f32 %v1464, 1.0
        %v1529 = vadd.f32 %v1465, 1.0
        %v1530 = vadd.f32 %v1466, 1.0
        %v1531 = vadd.f32 %v1467, 1.0
        %v1532 = vadd.f32 %v1468, 1.0
        %v1533 = vadd.f32 %v1469, 1.0
        %v1534 = vadd.f32 %v1470, 1.0
        %v1535 = vadd.f32 %v1471, 1.0
        %v1536 = vadd.f32 %v1472, 1.0
        %v1537 = vadd.f32 %v1473, 1.0
        %v1538 = vadd.f32 %v1474, 1.0
        %v1539 = vadd.f32 %v1475, 1.0
        %v1540 = vadd.f32 %v1476, 1.0
        %v1541 = vadd.f32 %v1477, 1.0
        %v1542 = vadd.f32 %v1478, 1.0
        %v1543 = vadd.f32 %v1479, 1.0
        %v1544 = vadd.f32 %v1480, 1.0
        %v1545 = vadd.f32 %v1481, 1.0
        %v1546 = vadd.f32 %v1482, 1.0
        %v1547 = vadd.f32 %v1483, 1.0
        %v1548 = vadd.f32 %v1484, 1.0
        %v1549 = vadd.f32 %v1485, 1.0
        %v1550 = vadd.f32 %v1486, 1.0
        %v1551 = vadd.f32 %v1487, 1.0
        %v1552 = vadd.f32 %v1488, 1.0
        %v1553 = vadd.f32 %v1489, 1.0
        %v1554 = vadd.f32 %v1490, 1.0
        %v1555 = vadd.f32 %v1491, 1.0
        %v1556 = vmul.f32 %v1044, %v1492
        %v1557 = vmul.f32 %v1045, %v1493
        %v1558 = vmul.f32 %v1046, %v1494
        %v1559 = vmul.f32 %v1047, %v1495
        %v1560 = vmul.f32 %v1048, %v1496
        %v1561 = vmul.f32 %v1049, %v1497
        %v1562 = vmul.f32 %v1050, %v1498
        %v1563 = vmul.f32 %v1051, %v1499
        %v1564 = vmul.f32 %v1052, %v1500
        %v1565 = vmul.f32 %v1053, %v1501
        %v1566 = vmul.f32 %v1054, %v1502
        %v1567 = vmul.f32 %v1055, %v1503
        %v1568 = vmul.f32 %v1056, %v1504
        %v1569 = vmul.f32 %v1057, %v1505
        %v1570 = vmul.f32 %v1058, %v1506
        %v1571 = vmul.f32 %v1059, %v1507
        %v1572 = vmul.f32 %v1060, %v1508
        %v1573 = vmul.f32 %v1061, %v1509
        %v1574 = vmul.f32 %v1062, %v1510
        %v1575 = vmul.f32 %v1063, %v1511
        %v1576 = vmul.f32 %v1064, %v1512
        %v1577 = vmul.f32 %v1065, %v1513
        %v1578 = vmul.f32 %v1066, %v1514
        %v1579 = vmul.f32 %v1067, %v1515
        %v1580 = vmul.f32 %v1068, %v1516
        %v1581 = vmul.f32 %v1069, %v1517
        %v1582 = vmul.f32 %v1070, %v1518
        %v1583 = vmul.f32 %v1071, %v1519
        %v1584 = vmul.f32 %v1072, %v1520
        %v1585 = vmul.f32 %v1073, %v1521
        %v1586 = vmul.f32 %v1074, %v1522
        %v1587 = vmul.f32 %v1075, %v1523
        %v1588 = vmul.f32 %v1076, %v1524
        %v1589 = vmul.f32 %v1077, %v1525
        %v1590 = vmul.f32 %v1078, %v1526
        %v1591 = vmul.f32 %v1079, %v1527
        %v1592 = vmul.f32 %v1080, %v1528
        %v1593 = vmul.f32 %v1081, %v1529
        %v1594 = vmul.f32 %v1082, %v1530
        %v1595 = vmul.f32 %v1083, %v1531
        %v1596 = vmul.f32 %v1084, %v1532
        %v1597 = vmul.f32 %v1085, %v1533
        %v1598 = vmul.f32 %v1086, %v1534
        %v1599 = vmul.f32 %v1087, %v1535
        %v1600 = vmul.f32 %v1088, %v1536
        %v1601 = vmul.f32 %v1089, %v1537
        %v1602 = vmul.f32 %v1090, %v1538
        %v1603 = vmul.f32 %v1091, %v1539
        %v1604 = vmul.f32 %v1092, %v1540
        %v1605 = vmul.f32 %v1093, %v1541
        %v1606 = vmul.f32 %v1094, %v1542
        %v1607 = vmul.f32 %v1095, %v1543
        %v1608 = vmul.f32 %v1096, %v1544
        %v1609 = vmul.f32 %v1097, %v1545
        %v1610 = vmul.f32 %v1098, %v1546
        %v1611 = vmul.f32 %v1099, %v1547
        %v1612 = vmul.f32 %v1100, %v1548
        %v1613 = vmul.f32 %v1101, %v1549
        %v1614 = vmul.f32 %v1102, %v1550
        %v1615 = vmul.f32 %v1103, %v1551
        %v1616 = vmul.f32 %v1104, %v1552
        %v1617 = vmul.f32 %v1105, %v1553
        %v1618 = vmul.f32 %v1106, %v1554
        %v1619 = vmul.f32 %v1107, %v1555
        %v1620 = vld [vmem:[%s322] sm:$0xff]
        %v1621 = vld [vmem:[%s322 + $0x8] sm:$0xff]
        %v1622 = vld [vmem:[%s322 + $0x10] sm:$0xff]
        %v1623 = vld [vmem:[%s322 + $0x18] sm:$0xff]
        %v1624 = vld [vmem:[%s322 + $0x20] sm:$0xff]
        %v1625 = vld [vmem:[%s322 + $0x28] sm:$0xff]
        %v1626 = vld [vmem:[%s322 + $0x30] sm:$0xff]
        %v1627 = vld [vmem:[%s322 + $0x38] sm:$0xff]
        %v1628 = vld [vmem:[%s322 + $0x40] sm:$0xff]
        %v1629 = vld [vmem:[%s322 + $0x48] sm:$0xff]
        %v1630 = vld [vmem:[%s322 + $0x50] sm:$0xff]
        %v1631 = vld [vmem:[%s322 + $0x58] sm:$0xff]
        %v1632 = vld [vmem:[%s322 + $0x60] sm:$0xff]
        %v1633 = vld [vmem:[%s322 + $0x68] sm:$0xff]
        %v1634 = vld [vmem:[%s322 + $0x70] sm:$0xff]
        %v1635 = vld [vmem:[%s322 + $0x78] sm:$0xff]
        %v1636 = vld [vmem:[%s322 + $0x80] sm:$0xff]
        %v1637 = vld [vmem:[%s322 + $0x88] sm:$0xff]
        %v1638 = vld [vmem:[%s322 + $0x90] sm:$0xff]
        %v1639 = vld [vmem:[%s322 + $0x98] sm:$0xff]
        %v1640 = vld [vmem:[%s322 + $0xa0] sm:$0xff]
        %v1641 = vld [vmem:[%s322 + $0xa8] sm:$0xff]
        %v1642 = vld [vmem:[%s322 + $0xb0] sm:$0xff]
        %v1643 = vld [vmem:[%s322 + $0xb8] sm:$0xff]
        %v1644 = vld [vmem:[%s322 + $0xc0] sm:$0xff]
        %v1645 = vld [vmem:[%s322 + $0xc8] sm:$0xff]
        %v1646 = vld [vmem:[%s322 + $0xd0] sm:$0xff]
        %v1647 = vld [vmem:[%s322 + $0xd8] sm:$0xff]
        %v1648 = vld [vmem:[%s322 + $0xe0] sm:$0xff]
        %v1649 = vld [vmem:[%s322 + $0xe8] sm:$0xff]
        %v1650 = vld [vmem:[%s322 + $0xf0] sm:$0xff]
        %v1651 = vld [vmem:[%s322 + $0xf8] sm:$0xff]
        %v1652 = vpack.c.bf16 %v1560, %v1556
        %v1653 = vpack.c.bf16 %v1561, %v1557
        %v1654 = vpack.c.bf16 %v1562, %v1558
        %v1655 = vpack.c.bf16 %v1563, %v1559
        %v1656 = vpack.c.bf16 %v1568, %v1564
        %v1657 = vpack.c.bf16 %v1569, %v1565
        %v1658 = vpack.c.bf16 %v1570, %v1566
        %v1659 = vpack.c.bf16 %v1571, %v1567
        %v1660 = vpack.c.bf16 %v1576, %v1572
        %v1661 = vpack.c.bf16 %v1577, %v1573
        %v1662 = vpack.c.bf16 %v1578, %v1574
        %v1663 = vpack.c.bf16 %v1579, %v1575
        %v1664 = vpack.c.bf16 %v1584, %v1580
        %v1665 = vpack.c.bf16 %v1585, %v1581
        %v1666 = vpack.c.bf16 %v1586, %v1582
        %v1667 = vpack.c.bf16 %v1587, %v1583
        %v1668 = vpack.c.bf16 %v1592, %v1588
        %v1669 = vpack.c.bf16 %v1593, %v1589
        %v1670 = vpack.c.bf16 %v1594, %v1590
        %v1671 = vpack.c.bf16 %v1595, %v1591
        %v1672 = vpack.c.bf16 %v1600, %v1596
        %v1673 = vpack.c.bf16 %v1601, %v1597
        %v1674 = vpack.c.bf16 %v1602, %v1598
        %v1675 = vpack.c.bf16 %v1603, %v1599
        %v1676 = vpack.c.bf16 %v1608, %v1604
        %v1677 = vpack.c.bf16 %v1609, %v1605
        %v1678 = vpack.c.bf16 %v1610, %v1606
        %v1679 = vpack.c.bf16 %v1611, %v1607
        %v1680 = vpack.c.bf16 %v1616, %v1612
        %v1681 = vpack.c.bf16 %v1617, %v1613
        %v1682 = vpack.c.bf16 %v1618, %v1614
        %v1683 = vpack.c.bf16 %v1619, %v1615
        %v1684 = vld [vmem:[#allocation8] sm:$0xff]
        %v1685 = vld [vmem:[#allocation8 + $0x8] sm:$0xff]
        %v1686 = vld [vmem:[#allocation8 + $0x10] sm:$0xff]
        %v1687 = vld [vmem:[#allocation8 + $0x18] sm:$0xff]
        %v1688 = vld [vmem:[#allocation8 + $0x20] sm:$0xff]
        %v1689 = vld [vmem:[#allocation8 + $0x28] sm:$0xff]
        %v1690 = vld [vmem:[#allocation8 + $0x30] sm:$0xff]
        %v1691 = vld [vmem:[#allocation8 + $0x38] sm:$0xff]
        %v1692 = vld [vmem:[#allocation8 + $0x40] sm:$0xff]
        %v1693 = vld [vmem:[#allocation8 + $0x48] sm:$0xff]
        %v1694 = vld [vmem:[#allocation8 + $0x50] sm:$0xff]
        %v1695 = vld [vmem:[#allocation8 + $0x58] sm:$0xff]
        %v1696 = vld [vmem:[#allocation8 + $0x60] sm:$0xff]
        %v1697 = vld [vmem:[#allocation8 + $0x68] sm:$0xff]
        %v1698 = vld [vmem:[#allocation8 + $0x70] sm:$0xff]
        %v1699 = vld [vmem:[#allocation8 + $0x78] sm:$0xff]
        %v1700 = vld [vmem:[#allocation8 + $0x80] sm:$0xff]
        %v1701 = vld [vmem:[#allocation8 + $0x88] sm:$0xff]
        %v1702 = vld [vmem:[#allocation8 + $0x90] sm:$0xff]
        %v1703 = vld [vmem:[#allocation8 + $0x98] sm:$0xff]
        %v1704 = vld [vmem:[#allocation8 + $0xa0] sm:$0xff]
        %v1705 = vld [vmem:[#allocation8 + $0xa8] sm:$0xff]
        %v1706 = vld [vmem:[#allocation8 + $0xb0] sm:$0xff]
        %v1707 = vld [vmem:[#allocation8 + $0xb8] sm:$0xff]
        %v1708 = vld [vmem:[#allocation8 + $0xc0] sm:$0xff]
        %v1709 = vld [vmem:[#allocation8 + $0xc8] sm:$0xff]
        %v1710 = vld [vmem:[#allocation8 + $0xd0] sm:$0xff]
        %v1711 = vld [vmem:[#allocation8 + $0xd8] sm:$0xff]
        %v1712 = vld [vmem:[#allocation8 + $0xe0] sm:$0xff]
        %v1713 = vld [vmem:[#allocation8 + $0xe8] sm:$0xff]
        %v1714 = vld [vmem:[#allocation8 + $0xf0] sm:$0xff]
        %v1715 = vld [vmem:[#allocation8 + $0xf8] sm:$0xff]
        %v1716 = vld [vmem:[#allocation8 + $0x100] sm:$0xff]
        %v1717 = vld [vmem:[#allocation8 + $0x108] sm:$0xff]
        %v1718 = vld [vmem:[#allocation8 + $0x110] sm:$0xff]
        %v1719 = vld [vmem:[#allocation8 + $0x118] sm:$0xff]
        %v1720 = vld [vmem:[#allocation8 + $0x120] sm:$0xff]
        %v1721 = vld [vmem:[#allocation8 + $0x128] sm:$0xff]
        %v1722 = vld [vmem:[#allocation8 + $0x130] sm:$0xff]
        %v1723 = vld [vmem:[#allocation8 + $0x138] sm:$0xff]
        %v1724 = vld [vmem:[#allocation8 + $0x140] sm:$0xff]
        %v1725 = vld [vmem:[#allocation8 + $0x148] sm:$0xff]
        %v1726 = vld [vmem:[#allocation8 + $0x150] sm:$0xff]
        %v1727 = vld [vmem:[#allocation8 + $0x158] sm:$0xff]
        %v1728 = vld [vmem:[#allocation8 + $0x160] sm:$0xff]
        %v1729 = vld [vmem:[#allocation8 + $0x168] sm:$0xff]
        %v1730 = vld [vmem:[#allocation8 + $0x170] sm:$0xff]
        %v1731 = vld [vmem:[#allocation8 + $0x178] sm:$0xff]
        %v1732 = vld [vmem:[#allocation8 + $0x180] sm:$0xff]
        %v1733 = vld [vmem:[#allocation8 + $0x188] sm:$0xff]
        %v1734 = vld [vmem:[#allocation8 + $0x190] sm:$0xff]
        %v1735 = vld [vmem:[#allocation8 + $0x198] sm:$0xff]
        %v1736 = vld [vmem:[#allocation8 + $0x1a0] sm:$0xff]
        %v1737 = vld [vmem:[#allocation8 + $0x1a8] sm:$0xff]
        %v1738 = vld [vmem:[#allocation8 + $0x1b0] sm:$0xff]
        %v1739 = vld [vmem:[#allocation8 + $0x1b8] sm:$0xff]
        %v1740 = vld [vmem:[#allocation8 + $0x1c0] sm:$0xff]
        %v1741 = vld [vmem:[#allocation8 + $0x1c8] sm:$0xff]
        %v1742 = vld [vmem:[#allocation8 + $0x1d0] sm:$0xff]
        %v1743 = vld [vmem:[#allocation8 + $0x1d8] sm:$0xff]
        %v1744 = vld [vmem:[#allocation8 + $0x1e0] sm:$0xff]
        %v1745 = vld [vmem:[#allocation8 + $0x1e8] sm:$0xff]
        %v1746 = vld [vmem:[#allocation8 + $0x1f0] sm:$0xff]
        %v1747 = vld [vmem:[#allocation8 + $0x1f8] sm:$0xff]
        %v1812 = vunpack.c.l.b16 %v1684
        %v1813 = vunpack.c.h.b16 %v1684
        %v1814 = vunpack.c.l.b16 %v1685
        %v1815 = vunpack.c.h.b16 %v1685
        %v1816 = vunpack.c.l.b16 %v1686
        %v1817 = vunpack.c.h.b16 %v1686
        %v1818 = vunpack.c.l.b16 %v1687
        %v1819 = vunpack.c.h.b16 %v1687
        %v1820 = vunpack.c.l.b16 %v1688
        %v1821 = vunpack.c.h.b16 %v1688
        %v1822 = vunpack.c.l.b16 %v1689
        %v1823 = vunpack.c.h.b16 %v1689
        %v1824 = vunpack.c.l.b16 %v1690
        %v1825 = vunpack.c.h.b16 %v1690
        %v1826 = vunpack.c.l.b16 %v1691
        %v1827 = vunpack.c.h.b16 %v1691
        %v1828 = vunpack.c.l.b16 %v1692
        %v1829 = vunpack.c.h.b16 %v1692
        %v1830 = vunpack.c.l.b16 %v1693
        %v1831 = vunpack.c.h.b16 %v1693
        %v1832 = vunpack.c.l.b16 %v1694
        %v1833 = vunpack.c.h.b16 %v1694
        %v1834 = vunpack.c.l.b16 %v1695
        %v1835 = vunpack.c.h.b16 %v1695
        %v1836 = vunpack.c.l.b16 %v1696
        %v1837 = vunpack.c.h.b16 %v1696
        %v1838 = vunpack.c.l.b16 %v1697
        %v1839 = vunpack.c.h.b16 %v1697
        %v1840 = vunpack.c.l.b16 %v1698
        %v1841 = vunpack.c.h.b16 %v1698
        %v1842 = vunpack.c.l.b16 %v1699
        %v1843 = vunpack.c.h.b16 %v1699
        %v1844 = vunpack.c.l.b16 %v1700
        %v1845 = vunpack.c.h.b16 %v1700
        %v1846 = vunpack.c.l.b16 %v1701
        %v1847 = vunpack.c.h.b16 %v1701
        %v1848 = vunpack.c.l.b16 %v1702
        %v1849 = vunpack.c.h.b16 %v1702
        %v1850 = vunpack.c.l.b16 %v1703
        %v1851 = vunpack.c.h.b16 %v1703
        %v1852 = vunpack.c.l.b16 %v1704
        %v1853 = vunpack.c.h.b16 %v1704
        %v1854 = vunpack.c.l.b16 %v1705
        %v1855 = vunpack.c.h.b16 %v1705
        %v1856 = vunpack.c.l.b16 %v1706
        %v1857 = vunpack.c.h.b16 %v1706
        %v1858 = vunpack.c.l.b16 %v1707
        %v1859 = vunpack.c.h.b16 %v1707
        %v1860 = vunpack.c.l.b16 %v1708
        %v1861 = vunpack.c.h.b16 %v1708
        %v1862 = vunpack.c.l.b16 %v1709
        %v1863 = vunpack.c.h.b16 %v1709
        %v1864 = vunpack.c.l.b16 %v1710
        %v1865 = vunpack.c.h.b16 %v1710
        %v1866 = vunpack.c.l.b16 %v1711
        %v1867 = vunpack.c.h.b16 %v1711
        %v1868 = vunpack.c.l.b16 %v1712
        %v1869 = vunpack.c.h.b16 %v1712
        %v1870 = vunpack.c.l.b16 %v1713
        %v1871 = vunpack.c.h.b16 %v1713
        %v1872 = vunpack.c.l.b16 %v1714
        %v1873 = vunpack.c.h.b16 %v1714
        %v1874 = vunpack.c.l.b16 %v1715
        %v1875 = vunpack.c.h.b16 %v1715
        %v1876 = vunpack.c.l.b16 %v1716
        %v1877 = vunpack.c.h.b16 %v1716
        %v1878 = vunpack.c.l.b16 %v1717
        %v1879 = vunpack.c.h.b16 %v1717
        %v1880 = vunpack.c.l.b16 %v1718
        %v1881 = vunpack.c.h.b16 %v1718
        %v1882 = vunpack.c.l.b16 %v1719
        %v1883 = vunpack.c.h.b16 %v1719
        %v1884 = vunpack.c.l.b16 %v1720
        %v1885 = vunpack.c.h.b16 %v1720
        %v1886 = vunpack.c.l.b16 %v1721
        %v1887 = vunpack.c.h.b16 %v1721
        %v1888 = vunpack.c.l.b16 %v1722
        %v1889 = vunpack.c.h.b16 %v1722
        %v1890 = vunpack.c.l.b16 %v1723
        %v1891 = vunpack.c.h.b16 %v1723
        %v1892 = vunpack.c.l.b16 %v1724
        %v1893 = vunpack.c.h.b16 %v1724
        %v1894 = vunpack.c.l.b16 %v1725
        %v1895 = vunpack.c.h.b16 %v1725
        %v1896 = vunpack.c.l.b16 %v1726
        %v1897 = vunpack.c.h.b16 %v1726
        %v1898 = vunpack.c.l.b16 %v1727
        %v1899 = vunpack.c.h.b16 %v1727
        %v1900 = vunpack.c.l.b16 %v1728
        %v1901 = vunpack.c.h.b16 %v1728
        %v1902 = vunpack.c.l.b16 %v1729
        %v1903 = vunpack.c.h.b16 %v1729
        %v1904 = vunpack.c.l.b16 %v1730
        %v1905 = vunpack.c.h.b16 %v1730
        %v1906 = vunpack.c.l.b16 %v1731
        %v1907 = vunpack.c.h.b16 %v1731
        %v1908 = vunpack.c.l.b16 %v1732
        %v1909 = vunpack.c.h.b16 %v1732
        %v1910 = vunpack.c.l.b16 %v1733
        %v1911 = vunpack.c.h.b16 %v1733
        %v1912 = vunpack.c.l.b16 %v1734
        %v1913 = vunpack.c.h.b16 %v1734
        %v1914 = vunpack.c.l.b16 %v1735
        %v1915 = vunpack.c.h.b16 %v1735
        %v1916 = vunpack.c.l.b16 %v1736
        %v1917 = vunpack.c.h.b16 %v1736
        %v1918 = vunpack.c.l.b16 %v1737
        %v1919 = vunpack.c.h.b16 %v1737
        %v1920 = vunpack.c.l.b16 %v1738
        %v1921 = vunpack.c.h.b16 %v1738
        %v1922 = vunpack.c.l.b16 %v1739
        %v1923 = vunpack.c.h.b16 %v1739
        %v1924 = vunpack.c.l.b16 %v1740
        %v1925 = vunpack.c.h.b16 %v1740
        %v1926 = vunpack.c.l.b16 %v1741
        %v1927 = vunpack.c.h.b16 %v1741
        %v1928 = vunpack.c.l.b16 %v1742
        %v1929 = vunpack.c.h.b16 %v1742
        %v1930 = vunpack.c.l.b16 %v1743
        %v1931 = vunpack.c.h.b16 %v1743
        %v1932 = vunpack.c.l.b16 %v1744
        %v1933 = vunpack.c.h.b16 %v1744
        %v1934 = vunpack.c.l.b16 %v1745
        %v1935 = vunpack.c.h.b16 %v1745
        %v1936 = vunpack.c.l.b16 %v1746
        %v1937 = vunpack.c.h.b16 %v1746
        %v1938 = vunpack.c.l.b16 %v1747
        %v1939 = vunpack.c.h.b16 %v1747
        %v1940 = vpack.c.b16 %v1814, %v1812
        %v1941 = vpack.c.b16 %v1815, %v1813
        %v1942 = vpack.c.b16 %v1818, %v1816
        %v1943 = vpack.c.b16 %v1819, %v1817
        %v1944 = vpack.c.b16 %v1822, %v1820
        %v1945 = vpack.c.b16 %v1823, %v1821
        %v1946 = vpack.c.b16 %v1826, %v1824
        %v1947 = vpack.c.b16 %v1827, %v1825
        %v1948 = vpack.c.b16 %v1830, %v1828
        %v1949 = vpack.c.b16 %v1831, %v1829
        %v1950 = vpack.c.b16 %v1834, %v1832
        %v1951 = vpack.c.b16 %v1835, %v1833
        %v1952 = vpack.c.b16 %v1838, %v1836
        %v1953 = vpack.c.b16 %v1839, %v1837
        %v1954 = vpack.c.b16 %v1842, %v1840
        %v1955 = vpack.c.b16 %v1843, %v1841
        %v1956 = vpack.c.b16 %v1846, %v1844
        %v1957 = vpack.c.b16 %v1847, %v1845
        %v1958 = vpack.c.b16 %v1850, %v1848
        %v1959 = vpack.c.b16 %v1851, %v1849
        %v1960 = vpack.c.b16 %v1854, %v1852
        %v1961 = vpack.c.b16 %v1855, %v1853
        %v1962 = vpack.c.b16 %v1858, %v1856
        %v1963 = vpack.c.b16 %v1859, %v1857
        %v1964 = vpack.c.b16 %v1862, %v1860
        %v1965 = vpack.c.b16 %v1863, %v1861
        %v1966 = vpack.c.b16 %v1866, %v1864
        %v1967 = vpack.c.b16 %v1867, %v1865
        %v1968 = vpack.c.b16 %v1870, %v1868
        %v1969 = vpack.c.b16 %v1871, %v1869
        %v1970 = vpack.c.b16 %v1874, %v1872
        %v1971 = vpack.c.b16 %v1875, %v1873
        %v1972 = vpack.c.b16 %v1878, %v1876
        %v1973 = vpack.c.b16 %v1879, %v1877
        %v1974 = vpack.c.b16 %v1882, %v1880
        %v1975 = vpack.c.b16 %v1883, %v1881
        %v1976 = vpack.c.b16 %v1886, %v1884
        %v1977 = vpack.c.b16 %v1887, %v1885
        %v1978 = vpack.c.b16 %v1890, %v1888
        %v1979 = vpack.c.b16 %v1891, %v1889
        %v1980 = vpack.c.b16 %v1894, %v1892
        %v1981 = vpack.c.b16 %v1895, %v1893
        %v1982 = vpack.c.b16 %v1898, %v1896
        %v1983 = vpack.c.b16 %v1899, %v1897
        %v1984 = vpack.c.b16 %v1902, %v1900
        %v1985 = vpack.c.b16 %v1903, %v1901
        %v1986 = vpack.c.b16 %v1906, %v1904
        %v1987 = vpack.c.b16 %v1907, %v1905
        %v1988 = vpack.c.b16 %v1910, %v1908
        %v1989 = vpack.c.b16 %v1911, %v1909
        %v1990 = vpack.c.b16 %v1914, %v1912
        %v1991 = vpack.c.b16 %v1915, %v1913
        %v1992 = vpack.c.b16 %v1918, %v1916
        %v1993 = vpack.c.b16 %v1919, %v1917
        %v1994 = vpack.c.b16 %v1922, %v1920
        %v1995 = vpack.c.b16 %v1923, %v1921
        %v1996 = vpack.c.b16 %v1926, %v1924
        %v1997 = vpack.c.b16 %v1927, %v1925
        %v1998 = vpack.c.b16 %v1930, %v1928
        %v1999 = vpack.c.b16 %v1931, %v1929
        %v2000 = vpack.c.b16 %v1934, %v1932
        %v2001 = vpack.c.b16 %v1935, %v1933
        %v2002 = vpack.c.b16 %v1938, %v1936
        %v2003 = vpack.c.b16 %v1939, %v1937
        %2068 = vmatprep.subr.bf16.mxu0 %v1955
        %2069 = vmatpush1.bf16.msra.mxu0 %v1954
        %2070 = vmatprep.subr.bf16.mxu0 %v1953
        %2071 = vmatpush1.bf16.msra.mxu0 %v1952
        %2072 = vmatprep.subr.bf16.mxu0 %v1951
        %2073 = vmatpush1.bf16.msra.mxu0 %v1950
        %2074 = vmatprep.subr.bf16.mxu0 %v1949
        %2075 = vmatpush1.bf16.msra.mxu0 %v1948
        %2076 = vmatprep.subr.bf16.mxu0 %v1947
        %2077 = vmatpush1.bf16.msra.mxu0 %v1946
        %2078 = vmatprep.subr.bf16.mxu0 %v1945
        %2079 = vmatpush1.bf16.msra.mxu0 %v1944
        %2080 = vmatprep.subr.bf16.mxu0 %v1943
        %2081 = vmatpush1.bf16.msra.mxu0 %v1942
        %2082 = vmatprep.subr.bf16.mxu0 %v1941
        %2083 = vmatpush1.bf16.msra.mxu0 %v1940
        %2084 = vmatprep.subr.bf16.mxu0 %v1971
        %2085 = vmatpush2.bf16.msra.mxu0 %v1970
        %2086 = vmatprep.subr.bf16.mxu0 %v1969
        %2087 = vmatpush2.bf16.msra.mxu0 %v1968
        %2088 = vmatprep.subr.bf16.mxu0 %v1967
        %2089 = vmatpush2.bf16.msra.mxu0 %v1966
        %2090 = vmatprep.subr.bf16.mxu0 %v1965
        %2091 = vmatpush2.bf16.msra.mxu0 %v1964
        %2092 = vmatprep.subr.bf16.mxu0 %v1963
        %2093 = vmatpush2.bf16.msra.mxu0 %v1962
        %2094 = vmatprep.subr.bf16.mxu0 %v1961
        %2095 = vmatpush2.bf16.msra.mxu0 %v1960
        %2096 = vmatprep.subr.bf16.mxu0 %v1959
        %2097 = vmatpush2.bf16.msra.mxu0 %v1958
        %2098 = vmatprep.subr.bf16.mxu0 %v1957
        %2099 = vmatpush2.bf16.msra.mxu0 %v1956
        %2100 = vmatprep.mubr.bf16.mxu0 %v1653
        %2101 = vmatmul.mubr.bf16.gmra.mxu0 %v1652
        %v2102 = vpop.f32.mrf.mxu0
        %v2103 = vadd.f32 0.0, %v2102
        %v2104 = vpop.f32.mrf.mxu0
        %v2105 = vadd.f32 0.0, %v2104
        %v2106 = vpop.f32.mrf.mxu0
        %v2107 = vadd.f32 0.0, %v2106
        %v2108 = vpop.f32.mrf.mxu0
        %v2109 = vadd.f32 0.0, %v2108
        %2110 = vmatprep.mubr.bf16.mxu0 %v1657
        %2111 = vmatmul.mubr.bf16.gmra.mxu0 %v1656
        %v2112 = vpop.f32.mrf.mxu0
        %v2113 = vadd.f32 0.0, %v2112
        %v2114 = vpop.f32.mrf.mxu0
        %v2115 = vadd.f32 0.0, %v2114
        %v2116 = vpop.f32.mrf.mxu0
        %v2117 = vadd.f32 0.0, %v2116
        %v2118 = vpop.f32.mrf.mxu0
        %v2119 = vadd.f32 0.0, %v2118
        %2120 = vmatprep.mubr.bf16.mxu0 %v1661
        %2121 = vmatmul.mubr.bf16.gmra.mxu0 %v1660
        %v2122 = vpop.f32.mrf.mxu0
        %v2123 = vadd.f32 0.0, %v2122
        %v2124 = vpop.f32.mrf.mxu0
        %v2125 = vadd.f32 0.0, %v2124
        %v2126 = vpop.f32.mrf.mxu0
        %v2127 = vadd.f32 0.0, %v2126
        %v2128 = vpop.f32.mrf.mxu0
        %v2129 = vadd.f32 0.0, %v2128
        %2130 = vmatprep.mubr.bf16.mxu0 %v1665
        %2131 = vmatmul.mubr.bf16.gmra.mxu0 %v1664
        %v2132 = vpop.f32.mrf.mxu0
        %v2133 = vadd.f32 0.0, %v2132
        %v2134 = vpop.f32.mrf.mxu0
        %v2135 = vadd.f32 0.0, %v2134
        %v2136 = vpop.f32.mrf.mxu0
        %v2137 = vadd.f32 0.0, %v2136
        %v2138 = vpop.f32.mrf.mxu0
        %v2139 = vadd.f32 0.0, %v2138
        %2140 = vmatprep.mubr.bf16.mxu0 %v1669
        %2141 = vmatmul.mubr.bf16.gmra.mxu0 %v1668
        %v2142 = vpop.f32.mrf.mxu0
        %v2143 = vadd.f32 0.0, %v2142
        %v2144 = vpop.f32.mrf.mxu0
        %v2145 = vadd.f32 0.0, %v2144
        %v2146 = vpop.f32.mrf.mxu0
        %v2147 = vadd.f32 0.0, %v2146
        %v2148 = vpop.f32.mrf.mxu0
        %v2149 = vadd.f32 0.0, %v2148
        %2150 = vmatprep.mubr.bf16.mxu0 %v1673
        %2151 = vmatmul.mubr.bf16.gmra.mxu0 %v1672
        %v2152 = vpop.f32.mrf.mxu0
        %v2153 = vadd.f32 0.0, %v2152
        %v2154 = vpop.f32.mrf.mxu0
        %v2155 = vadd.f32 0.0, %v2154
        %v2156 = vpop.f32.mrf.mxu0
        %v2157 = vadd.f32 0.0, %v2156
        %v2158 = vpop.f32.mrf.mxu0
        %v2159 = vadd.f32 0.0, %v2158
        %2160 = vmatprep.mubr.bf16.mxu0 %v1677
        %2161 = vmatmul.mubr.bf16.gmra.mxu0 %v1676
        %v2162 = vpop.f32.mrf.mxu0
        %v2163 = vadd.f32 0.0, %v2162
        %v2164 = vpop.f32.mrf.mxu0
        %v2165 = vadd.f32 0.0, %v2164
        %v2166 = vpop.f32.mrf.mxu0
        %v2167 = vadd.f32 0.0, %v2166
        %v2168 = vpop.f32.mrf.mxu0
        %v2169 = vadd.f32 0.0, %v2168
        %2170 = vmatprep.mubr.bf16.mxu0 %v1681
        %2171 = vmatmul.mubr.bf16.gmra.mxu0 %v1680
        %v2172 = vpop.f32.mrf.mxu0
        %v2173 = vadd.f32 0.0, %v2172
        %v2174 = vpop.f32.mrf.mxu0
        %v2175 = vadd.f32 0.0, %v2174
        %v2176 = vpop.f32.mrf.mxu0
        %v2177 = vadd.f32 0.0, %v2176
        %v2178 = vpop.f32.mrf.mxu0
        %v2179 = vadd.f32 0.0, %v2178
        %2180 = vdwg.mxu0
        %2181 = vmatprep.subr.bf16.mxu0 %v1987
        %2182 = vmatpush1.bf16.msra.mxu0 %v1986
        %2183 = vmatprep.subr.bf16.mxu0 %v1985
        %2184 = vmatpush1.bf16.msra.mxu0 %v1984
        %2185 = vmatprep.subr.bf16.mxu0 %v1983
        %2186 = vmatpush1.bf16.msra.mxu0 %v1982
        %2187 = vmatprep.subr.bf16.mxu0 %v1981
        %2188 = vmatpush1.bf16.msra.mxu0 %v1980
        %2189 = vmatprep.subr.bf16.mxu0 %v1979
        %2190 = vmatpush1.bf16.msra.mxu0 %v1978
        %2191 = vmatprep.subr.bf16.mxu0 %v1977
        %2192 = vmatpush1.bf16.msra.mxu0 %v1976
        %2193 = vmatprep.subr.bf16.mxu0 %v1975
        %2194 = vmatpush1.bf16.msra.mxu0 %v1974
        %2195 = vmatprep.subr.bf16.mxu0 %v1973
        %2196 = vmatpush1.bf16.msra.mxu0 %v1972
        %2197 = vmatprep.subr.bf16.mxu0 %v2003
        %2198 = vmatpush2.bf16.msra.mxu0 %v2002
        %2199 = vmatprep.subr.bf16.mxu0 %v2001
        %2200 = vmatpush2.bf16.msra.mxu0 %v2000
        %2201 = vmatprep.subr.bf16.mxu0 %v1999
        %2202 = vmatpush2.bf16.msra.mxu0 %v1998
        %2203 = vmatprep.subr.bf16.mxu0 %v1997
        %2204 = vmatpush2.bf16.msra.mxu0 %v1996
        %2205 = vmatprep.subr.bf16.mxu0 %v1995
        %2206 = vmatpush2.bf16.msra.mxu0 %v1994
        %2207 = vmatprep.subr.bf16.mxu0 %v1993
        %2208 = vmatpush2.bf16.msra.mxu0 %v1992
        %2209 = vmatprep.subr.bf16.mxu0 %v1991
        %2210 = vmatpush2.bf16.msra.mxu0 %v1990
        %2211 = vmatprep.subr.bf16.mxu0 %v1989
        %2212 = vmatpush2.bf16.msra.mxu0 %v1988
        %2213 = vmatprep.mubr.bf16.mxu0 %v1655
        %2214 = vmatmul.mubr.bf16.gmra.mxu0 %v1654
        %v2215 = vpop.f32.mrf.mxu0
        %v2216 = vadd.f32 %v2103, %v2215
        %v2217 = vpop.f32.mrf.mxu0
        %v2218 = vadd.f32 %v2105, %v2217
        %v2219 = vpop.f32.mrf.mxu0
        %v2220 = vadd.f32 %v2107, %v2219
        %v2221 = vpop.f32.mrf.mxu0
        %v2222 = vadd.f32 %v2109, %v2221
        %2223 = vmatprep.mubr.bf16.mxu0 %v1659
        %2224 = vmatmul.mubr.bf16.gmra.mxu0 %v1658
        %v2225 = vpop.f32.mrf.mxu0
        %v2226 = vadd.f32 %v2113, %v2225
        %v2227 = vpop.f32.mrf.mxu0
        %v2228 = vadd.f32 %v2115, %v2227
        %v2229 = vpop.f32.mrf.mxu0
        %v2230 = vadd.f32 %v2117, %v2229
        %v2231 = vpop.f32.mrf.mxu0
        %v2232 = vadd.f32 %v2119, %v2231
        %2233 = vmatprep.mubr.bf16.mxu0 %v1663
        %2234 = vmatmul.mubr.bf16.gmra.mxu0 %v1662
        %v2235 = vpop.f32.mrf.mxu0
        %v2236 = vadd.f32 %v2123, %v2235
        %v2237 = vpop.f32.mrf.mxu0
        %v2238 = vadd.f32 %v2125, %v2237
        %v2239 = vpop.f32.mrf.mxu0
        %v2240 = vadd.f32 %v2127, %v2239
        %v2241 = vpop.f32.mrf.mxu0
        %v2242 = vadd.f32 %v2129, %v2241
        %2243 = vmatprep.mubr.bf16.mxu0 %v1667
        %2244 = vmatmul.mubr.bf16.gmra.mxu0 %v1666
        %v2245 = vpop.f32.mrf.mxu0
        %v2246 = vadd.f32 %v2133, %v2245
        %v2247 = vpop.f32.mrf.mxu0
        %v2248 = vadd.f32 %v2135, %v2247
        %v2249 = vpop.f32.mrf.mxu0
        %v2250 = vadd.f32 %v2137, %v2249
        %v2251 = vpop.f32.mrf.mxu0
        %v2252 = vadd.f32 %v2139, %v2251
        %2253 = vmatprep.mubr.bf16.mxu0 %v1671
        %2254 = vmatmul.mubr.bf16.gmra.mxu0 %v1670
        %v2255 = vpop.f32.mrf.mxu0
        %v2256 = vadd.f32 %v2143, %v2255
        %v2257 = vpop.f32.mrf.mxu0
        %v2258 = vadd.f32 %v2145, %v2257
        %v2259 = vpop.f32.mrf.mxu0
        %v2260 = vadd.f32 %v2147, %v2259
        %v2261 = vpop.f32.mrf.mxu0
        %v2262 = vadd.f32 %v2149, %v2261
        %2263 = vmatprep.mubr.bf16.mxu0 %v1675
        %2264 = vmatmul.mubr.bf16.gmra.mxu0 %v1674
        %v2265 = vpop.f32.mrf.mxu0
        %v2266 = vadd.f32 %v2153, %v2265
        %v2267 = vpop.f32.mrf.mxu0
        %v2268 = vadd.f32 %v2155, %v2267
        %v2269 = vpop.f32.mrf.mxu0
        %v2270 = vadd.f32 %v2157, %v2269
        %v2271 = vpop.f32.mrf.mxu0
        %v2272 = vadd.f32 %v2159, %v2271
        %2273 = vmatprep.mubr.bf16.mxu0 %v1679
        %2274 = vmatmul.mubr.bf16.gmra.mxu0 %v1678
        %v2275 = vpop.f32.mrf.mxu0
        %v2276 = vadd.f32 %v2163, %v2275
        %v2277 = vpop.f32.mrf.mxu0
        %v2278 = vadd.f32 %v2165, %v2277
        %v2279 = vpop.f32.mrf.mxu0
        %v2280 = vadd.f32 %v2167, %v2279
        %v2281 = vpop.f32.mrf.mxu0
        %v2282 = vadd.f32 %v2169, %v2281
        %2283 = vmatprep.mubr.bf16.mxu0 %v1683
        %2284 = vmatmul.mubr.bf16.gmra.mxu0 %v1682
        %v2285 = vpop.f32.mrf.mxu0
        %v2286 = vadd.f32 %v2173, %v2285
        %v2287 = vpop.f32.mrf.mxu0
        %v2288 = vadd.f32 %v2175, %v2287
        %v2289 = vpop.f32.mrf.mxu0
        %v2290 = vadd.f32 %v2177, %v2289
        %v2291 = vpop.f32.mrf.mxu0
        %v2292 = vadd.f32 %v2179, %v2291
        %2293 = vdwg.mxu0
        %v2294 = vadd.f32 %v1620, %v2216
        %v2295 = vadd.f32 %v1621, %v2218
        %v2296 = vadd.f32 %v1622, %v2220
        %v2297 = vadd.f32 %v1623, %v2222
        %v2298 = vadd.f32 %v1624, %v2226
        %v2299 = vadd.f32 %v1625, %v2228
        %v2300 = vadd.f32 %v1626, %v2230
        %v2301 = vadd.f32 %v1627, %v2232
        %v2302 = vadd.f32 %v1628, %v2236
        %v2303 = vadd.f32 %v1629, %v2238
        %v2304 = vadd.f32 %v1630, %v2240
        %v2305 = vadd.f32 %v1631, %v2242
        %v2306 = vadd.f32 %v1632, %v2246
        %v2307 = vadd.f32 %v1633, %v2248
        %v2308 = vadd.f32 %v1634, %v2250
        %v2309 = vadd.f32 %v1635, %v2252
        %v2310 = vadd.f32 %v1636, %v2256
        %v2311 = vadd.f32 %v1637, %v2258
        %v2312 = vadd.f32 %v1638, %v2260
        %v2313 = vadd.f32 %v1639, %v2262
        %v2314 = vadd.f32 %v1640, %v2266
        %v2315 = vadd.f32 %v1641, %v2268
        %v2316 = vadd.f32 %v1642, %v2270
        %v2317 = vadd.f32 %v1643, %v2272
        %v2318 = vadd.f32 %v1644, %v2276
        %v2319 = vadd.f32 %v1645, %v2278
        %v2320 = vadd.f32 %v1646, %v2280
        %v2321 = vadd.f32 %v1647, %v2282
        %v2322 = vadd.f32 %v1648, %v2286
        %v2323 = vadd.f32 %v1649, %v2288
        %v2324 = vadd.f32 %v1650, %v2290
        %v2325 = vadd.f32 %v1651, %v2292
        %2326 = vst [vmem:[%s322] sm:$0xff] %v2294
        %2327 = vst [vmem:[%s322 + $0x8] sm:$0xff] %v2295
        %2328 = vst [vmem:[%s322 + $0x10] sm:$0xff] %v2296
        %2329 = vst [vmem:[%s322 + $0x18] sm:$0xff] %v2297
        %2330 = vst [vmem:[%s322 + $0x20] sm:$0xff] %v2298
        %2331 = vst [vmem:[%s322 + $0x28] sm:$0xff] %v2299
        %2332 = vst [vmem:[%s322 + $0x30] sm:$0xff] %v2300
        %2333 = vst [vmem:[%s322 + $0x38] sm:$0xff] %v2301
        %2334 = vst [vmem:[%s322 + $0x40] sm:$0xff] %v2302
        %2335 = vst [vmem:[%s322 + $0x48] sm:$0xff] %v2303
        %2336 = vst [vmem:[%s322 + $0x50] sm:$0xff] %v2304
        %2337 = vst [vmem:[%s322 + $0x58] sm:$0xff] %v2305
        %2338 = vst [vmem:[%s322 + $0x60] sm:$0xff] %v2306
        %2339 = vst [vmem:[%s322 + $0x68] sm:$0xff] %v2307
        %2340 = vst [vmem:[%s322 + $0x70] sm:$0xff] %v2308
        %2341 = vst [vmem:[%s322 + $0x78] sm:$0xff] %v2309
        %2342 = vst [vmem:[%s322 + $0x80] sm:$0xff] %v2310
        %2343 = vst [vmem:[%s322 + $0x88] sm:$0xff] %v2311
        %2344 = vst [vmem:[%s322 + $0x90] sm:$0xff] %v2312
        %2345 = vst [vmem:[%s322 + $0x98] sm:$0xff] %v2313
        %2346 = vst [vmem:[%s322 + $0xa0] sm:$0xff] %v2314
        %2347 = vst [vmem:[%s322 + $0xa8] sm:$0xff] %v2315
        %2348 = vst [vmem:[%s322 + $0xb0] sm:$0xff] %v2316
        %2349 = vst [vmem:[%s322 + $0xb8] sm:$0xff] %v2317
        %2350 = vst [vmem:[%s322 + $0xc0] sm:$0xff] %v2318
        %2351 = vst [vmem:[%s322 + $0xc8] sm:$0xff] %v2319
        %2352 = vst [vmem:[%s322 + $0xd0] sm:$0xff] %v2320
        %2353 = vst [vmem:[%s322 + $0xd8] sm:$0xff] %v2321
        %2354 = vst [vmem:[%s322 + $0xe0] sm:$0xff] %v2322
        %2355 = vst [vmem:[%s322 + $0xe8] sm:$0xff] %v2323
        %2356 = vst [vmem:[%s322 + $0xf0] sm:$0xff] %v2324
        %2357 = vst [vmem:[%s322 + $0xf8] sm:$0xff] %v2325
        // Predicated region
        $region61: #{tpu_custom_call.1} parent=39 // pred_check
          %p2358 = pneg %p328
        $region62: #{tpu_custom_call.1} parent=39 // pred_check_branch
          %2360 = sbr.rel (%p2358) target = $region64
        $region63: #{tpu_custom_call.1} parent=39 // pred_region
          %v2361 = vld [vmem:[%s322] sm:$0xff]
          %v2362 = vld [vmem:[%s322 + $0x8] sm:$0xff]
          %v2363 = vld [vmem:[%s322 + $0x10] sm:$0xff]
          %v2364 = vld [vmem:[%s322 + $0x18] sm:$0xff]
          %v2365 = vld [vmem:[%s322 + $0x20] sm:$0xff]
          %v2366 = vld [vmem:[%s322 + $0x28] sm:$0xff]
          %v2367 = vld [vmem:[%s322 + $0x30] sm:$0xff]
          %v2368 = vld [vmem:[%s322 + $0x38] sm:$0xff]
          %v2369 = vld [vmem:[%s322 + $0x40] sm:$0xff]
          %v2370 = vld [vmem:[%s322 + $0x48] sm:$0xff]
          %v2371 = vld [vmem:[%s322 + $0x50] sm:$0xff]
          %v2372 = vld [vmem:[%s322 + $0x58] sm:$0xff]
          %v2373 = vld [vmem:[%s322 + $0x60] sm:$0xff]
          %v2374 = vld [vmem:[%s322 + $0x68] sm:$0xff]
          %v2375 = vld [vmem:[%s322 + $0x70] sm:$0xff]
          %v2376 = vld [vmem:[%s322 + $0x78] sm:$0xff]
          %v2377 = vld [vmem:[%s322 + $0x80] sm:$0xff]
          %v2378 = vld [vmem:[%s322 + $0x88] sm:$0xff]
          %v2379 = vld [vmem:[%s322 + $0x90] sm:$0xff]
          %v2380 = vld [vmem:[%s322 + $0x98] sm:$0xff]
          %v2381 = vld [vmem:[%s322 + $0xa0] sm:$0xff]
          %v2382 = vld [vmem:[%s322 + $0xa8] sm:$0xff]
          %v2383 = vld [vmem:[%s322 + $0xb0] sm:$0xff]
          %v2384 = vld [vmem:[%s322 + $0xb8] sm:$0xff]
          %v2385 = vld [vmem:[%s322 + $0xc0] sm:$0xff]
          %v2386 = vld [vmem:[%s322 + $0xc8] sm:$0xff]
          %v2387 = vld [vmem:[%s322 + $0xd0] sm:$0xff]
          %v2388 = vld [vmem:[%s322 + $0xd8] sm:$0xff]
          %v2389 = vld [vmem:[%s322 + $0xe0] sm:$0xff]
          %v2390 = vld [vmem:[%s322 + $0xe8] sm:$0xff]
          %v2391 = vld [vmem:[%s322 + $0xf0] sm:$0xff]
          %v2392 = vld [vmem:[%s322 + $0xf8] sm:$0xff]
          %v2393 = vld [vmem:[%s4] sm:$0x3]
          %v2395 = vlaneseq
          %v2396 = vshrl.u32 %v2395, 7
          %v2397 = vsub.s32 0, %v2396
          %v2398 = vrot.slane %v2393, %v2397
          %v2399 = vlaneseq
          %v2400 = vshrl.u32 %v2399, 7
          %v2401 = vsub.s32 1, %v2400
          %v2402 = vrot.slane %v2393, %v2401
          %v2405 = vadd.f32 %v2361, %v2398
          %v2406 = vadd.f32 %v2362, %v2402
          %v2407 = vadd.f32 %v2363, %v2398
          %v2408 = vadd.f32 %v2364, %v2402
          %v2409 = vadd.f32 %v2365, %v2398
          %v2410 = vadd.f32 %v2366, %v2402
          %v2411 = vadd.f32 %v2367, %v2398
          %v2412 = vadd.f32 %v2368, %v2402
          %v2413 = vadd.f32 %v2369, %v2398
          %v2414 = vadd.f32 %v2370, %v2402
          %v2415 = vadd.f32 %v2371, %v2398
          %v2416 = vadd.f32 %v2372, %v2402
          %v2417 = vadd.f32 %v2373, %v2398
          %v2418 = vadd.f32 %v2374, %v2402
          %v2419 = vadd.f32 %v2375, %v2398
          %v2420 = vadd.f32 %v2376, %v2402
          %v2421 = vadd.f32 %v2377, %v2398
          %v2422 = vadd.f32 %v2378, %v2402
          %v2423 = vadd.f32 %v2379, %v2398
          %v2424 = vadd.f32 %v2380, %v2402
          %v2425 = vadd.f32 %v2381, %v2398
          %v2426 = vadd.f32 %v2382, %v2402
          %v2427 = vadd.f32 %v2383, %v2398
          %v2428 = vadd.f32 %v2384, %v2402
          %v2429 = vadd.f32 %v2385, %v2398
          %v2430 = vadd.f32 %v2386, %v2402
          %v2431 = vadd.f32 %v2387, %v2398
          %v2432 = vadd.f32 %v2388, %v2402
          %v2433 = vadd.f32 %v2389, %v2398
          %v2434 = vadd.f32 %v2390, %v2402
          %v2435 = vadd.f32 %v2391, %v2398
          %v2436 = vadd.f32 %v2392, %v2402
          %2437 = vst [vmem:[%s322] sm:$0xff] %v2405
          %2438 = vst [vmem:[%s322 + $0x8] sm:$0xff] %v2406
          %2439 = vst [vmem:[%s322 + $0x10] sm:$0xff] %v2407
          %2440 = vst [vmem:[%s322 + $0x18] sm:$0xff] %v2408
          %2441 = vst [vmem:[%s322 + $0x20] sm:$0xff] %v2409
          %2442 = vst [vmem:[%s322 + $0x28] sm:$0xff] %v2410
          %2443 = vst [vmem:[%s322 + $0x30] sm:$0xff] %v2411
          %2444 = vst [vmem:[%s322 + $0x38] sm:$0xff] %v2412
          %2445 = vst [vmem:[%s322 + $0x40] sm:$0xff] %v2413
          %2446 = vst [vmem:[%s322 + $0x48] sm:$0xff] %v2414
          %2447 = vst [vmem:[%s322 + $0x50] sm:$0xff] %v2415
          %2448 = vst [vmem:[%s322 + $0x58] sm:$0xff] %v2416
          %2449 = vst [vmem:[%s322 + $0x60] sm:$0xff] %v2417
          %2450 = vst [vmem:[%s322 + $0x68] sm:$0xff] %v2418
          %2451 = vst [vmem:[%s322 + $0x70] sm:$0xff] %v2419
          %2452 = vst [vmem:[%s322 + $0x78] sm:$0xff] %v2420
          %2453 = vst [vmem:[%s322 + $0x80] sm:$0xff] %v2421
          %2454 = vst [vmem:[%s322 + $0x88] sm:$0xff] %v2422
          %2455 = vst [vmem:[%s322 + $0x90] sm:$0xff] %v2423
          %2456 = vst [vmem:[%s322 + $0x98] sm:$0xff] %v2424
          %2457 = vst [vmem:[%s322 + $0xa0] sm:$0xff] %v2425
          %2458 = vst [vmem:[%s322 + $0xa8] sm:$0xff] %v2426
          %2459 = vst [vmem:[%s322 + $0xb0] sm:$0xff] %v2427
          %2460 = vst [vmem:[%s322 + $0xb8] sm:$0xff] %v2428
          %2461 = vst [vmem:[%s322 + $0xc0] sm:$0xff] %v2429
          %2462 = vst [vmem:[%s322 + $0xc8] sm:$0xff] %v2430
          %2463 = vst [vmem:[%s322 + $0xd0] sm:$0xff] %v2431
          %2464 = vst [vmem:[%s322 + $0xd8] sm:$0xff] %v2432
          %2465 = vst [vmem:[%s322 + $0xe0] sm:$0xff] %v2433
          %2466 = vst [vmem:[%s322 + $0xe8] sm:$0xff] %v2434
          %2467 = vst [vmem:[%s322 + $0xf0] sm:$0xff] %v2435
          %2468 = vst [vmem:[%s322 + $0xf8] sm:$0xff] %v2436
        $region64: #{tpu_custom_call.1} parent=39 // pred_fallthru
          _
        %s2469 = sand.u32 %s169, 1
        %s2470 = scalar_lea.sflag [#allocation4], %s2469
        %s2471 = sand.u32 %s169, 1
        %s2472 = smul.addr %s2471, 256
        %s2473 = scalar_lea.vmem [#allocation10], %s2472
        // Predicated region
        $region65: #{tpu_custom_call.1} parent=39 // pred_check
          %p2474 = pneg %p179
        $region66: #{tpu_custom_call.1} parent=39 // pred_check_branch
          %2476 = sbr.rel (%p2474) target = $region68
        $region67: #{tpu_custom_call.1} parent=39 // pred_region
          %s2477 = smul.u32 16, %s28
          %s2479 = ssub.s32 4096, 4096
          %2480 = vsyncadd %s2470, %s2479
          %s2481 = smul.addr %s2477, 2
          %s2482 = smul.addr %s2481, 128
          %s2483 = scalar_lea.hbm %s5, %s2482
          %s2484 = sshll.u32 %s2473, 4
          %s2485 = int_to_ptr.vmem [resolvable:$true] %s2484
          %2490 = dma.vmem_to_hbm [thread:$0]  %s2485, 4096, %s2483, %s2470, 256, 256, 16
        $region68: #{tpu_custom_call.1} parent=39 // pred_fallthru
          _
      $region40: #{tpu_custom_call.1} parent=5 // pred_fallthru
        _
      %p2491 = scmp.le.s32.totalorder 2, %s19
      // Predicated region
      $region69: #{tpu_custom_call.1} parent=5 // pred_check
        %p2492 = pneg %p2491
      $region70: #{tpu_custom_call.1} parent=5 // pred_check_branch
        %2494 = sbr.rel (%p2492) target = $region72
      $region71: #{tpu_custom_call.1} parent=5 // pred_region
        %s2495 = ssub.s32 %s19, 2
        // Predicated region
        $region73: #{tpu_custom_call.1} parent=71 // pred_check
          %p2496 = pneg %p185
        $region74: #{tpu_custom_call.1} parent=71 // pred_check_branch
          %2498 = sbr.rel (%p2496) target = $region76
        $region75: #{tpu_custom_call.1} parent=71 // pred_region
          %s2499 = sand.u32 %s170, 1
          %s2500 = scalar_lea.sflag [#allocation4], %s2499
          %s2501 = sand.u32 %s170, 1
          %s2502 = smul.addr %s2501, 256
          %s2503 = scalar_lea.vmem [#allocation10], %s2502
          %2504 = dma.done %s2500, 4096
        $region76: #{tpu_custom_call.1} parent=71 // pred_fallthru
          _
      $region72: #{tpu_custom_call.1} parent=5 // pred_fallthru
        _
    $region6: #{tpu_custom_call.1} parent=1 // loop_footer
      %s23 = sadd.s32 1, %s19
    $region7: #{tpu_custom_call.1} parent=1 // loop_footer_branch
      %18 = sbr.rel target = $region3
    $region8: #{tpu_custom_call.1} parent=1 // loop_exit
      _
    %2505 = vsyncpa [#allocation3], 1
    %s2506 = scalar_lea.sflag [#allocation3], 1
    %2507 = vsyncpa %s2506, 1
    %2508 = vsyncpa [#allocation6], 1
    %2509 = vsyncpa [#allocation9], 1
    %2510 = vsyncpa [#allocation4], 1
    %s2511 = scalar_lea.sflag [#allocation4], 1
    %2512 = vsyncpa %s2511, 1

</llo_original>
